<compile_context>
chip_gen: v7x
topology: tpu7x:2x2x1
jax: 0.10.0
libtpu: 0.0.40
codegen_flags: <defaults>
</compile_context>

<pallas_src>
import jax
import jax.numpy as jnp
from jax.experimental import pallas as pl
from jax.experimental.pallas import tpu as pltpu

# SELU constants (match torch.selu)
_SELU_ALPHA = 1.6732632423543772848170429916717
_SELU_SCALE = 1.0507009873554804934193349852946
_LANE = 128  # TPU lane width


def _selu(x):
    return _SELU_SCALE * jnp.where(x > 0, x, _SELU_ALPHA * (jnp.exp(x) - 1.0))


def _round_up(x, m):
    return ((x + m - 1) // m) * m


def _pad2(a, rows, cols):
    return jnp.pad(a, ((0, rows - a.shape[0]), (0, cols - a.shape[1])))


def _vae_kernel(
    x_ref, eps_ref,
    w1_ref, b1_ref,
    wml_ref, bml_ref,       # fused fc21||fc22 : [Hp, 2*Lp], [1, 2*Lp]
    w3_ref, b3_ref,
    w4_ref, b4_ref,
    recon_ref, mulv_ref,
):
    x = x_ref[...]

    # encode: h1 = tanh(fc1(x))
    h1 = jnp.tanh(
        jnp.dot(x, w1_ref[...], preferred_element_type=jnp.float32) + b1_ref[...]
    )

    # fused head: [mu || logvar] = selu(fc21||fc22 (h1))
    mulv = _selu(
        jnp.dot(h1, wml_ref[...], preferred_element_type=jnp.float32) + bml_ref[...]
    )
    Lp = mulv.shape[1] // 2
    mu = mulv[:, :Lp]
    logvar = mulv[:, Lp:]

    # reparametrize: z = eps * exp(0.5 * logvar) + mu
    # (padded logvar cols are selu(0)=0 -> std=1, but eps is zero-padded so z stays 0 there)
    z = eps_ref[...] * jnp.exp(0.5 * logvar) + mu

    # decode: recon = tanh(fc4(tanh(fc3(z))))
    h3 = jnp.tanh(
        jnp.dot(z, w3_ref[...], preferred_element_type=jnp.float32) + b3_ref[...]
    )
    recon = jnp.tanh(
        jnp.dot(h3, w4_ref[...], preferred_element_type=jnp.float32) + b4_ref[...]
    )

    recon_ref[...] = recon.astype(recon_ref.dtype)
    mulv_ref[...] = mulv.astype(mulv_ref.dtype)


def vae_forward(x, eps, params, *, batch_tile=128):
    """Run the VAE forward pass as a Pallas kernel.

    x:   [B, input_size] float32
    eps: [B, latent_size] float32 (standard-normal noise)
    params: dict of weights ([in, out]) and biases ([1, out])
    returns (recon, mu, logvar) with the true (unpadded) shapes.
    """
    B, D_in = x.shape
    H = params["w1"].shape[1]
    L = params["w21"].shape[1]

    # Lane-pad feature dims, tile/pad batch.
    Dp = _round_up(D_in, _LANE)
    Hp = _round_up(H, _LANE)
    Lp = _round_up(L, _LANE)

    # Big batch tiles amortize the ~0.35us/step pipeline overhead; cap so the
    # grid still has >=2 steps when the batch allows (keeps both v7x TCs busy).
    tb = max(8, min(batch_tile, _round_up(pl.cdiv(B, 2), 8)))
    Bp = _round_up(B, tb)
    grid = (Bp // tb,)

    # Zero-pad inputs / weights / biases to lane-dense shapes.
    x_p = _pad2(x, Bp, Dp)
    eps_p = _pad2(eps, Bp, Lp)                      # zero pad -> padded z cols stay 0
    w1 = _pad2(params["w1"], Dp, Hp)
    b1 = _pad2(params["b1"], 1, Hp)
    w21 = _pad2(params["w21"], Hp, Lp)
    b21 = _pad2(params["b21"], 1, Lp)
    w22 = _pad2(params["w22"], Hp, Lp)
    b22 = _pad2(params["b22"], 1, Lp)
    wml = jnp.concatenate([w21, w22], axis=1)       # [Hp, 2*Lp] fused fc21||fc22
    bml = jnp.concatenate([b21, b22], axis=1)       # [1, 2*Lp]
    w3 = _pad2(params["w3"], Lp, Hp)
    b3 = _pad2(params["b3"], 1, Hp)
    w4 = _pad2(params["w4"], Hp, Dp)
    b4 = _pad2(params["b4"], 1, Dp)

    def batch_spec(feat):
        return pl.BlockSpec((tb, feat), lambda i: (i, 0))

    def full_spec(shape):
        # Weights/biases are resident across the whole grid (constant index_map).
        # TODO(synk): on v7x at large hidden sizes, add pipeline_mode=pl.Buffered(1)
        # here to single-buffer the resident weights (64 MiB VMEM budget).
        return pl.BlockSpec(shape, lambda i: (0, 0))

    in_specs = [
        batch_spec(Dp),                    # x
        batch_spec(Lp),                    # eps
        full_spec((Dp, Hp)), full_spec((1, Hp)),        # fc1
        full_spec((Hp, 2 * Lp)), full_spec((1, 2 * Lp)),  # fused fc21||fc22
        full_spec((Lp, Hp)), full_spec((1, Hp)),        # fc3
        full_spec((Hp, Dp)), full_spec((1, Dp)),        # fc4
    ]
    out_specs = [
        batch_spec(Dp),        # recon (padded)
        batch_spec(2 * Lp),    # mu || logvar (padded)
    ]
    out_shape = [
        jax.ShapeDtypeStruct((Bp, Dp), jnp.float32),
        jax.ShapeDtypeStruct((Bp, 2 * Lp), jnp.float32),
    ]

    fn = pl.pallas_call(
        _vae_kernel,
        out_shape=out_shape,
        grid_spec=pltpu.PrefetchScalarGridSpec(
            num_scalar_prefetch=0,
            grid=grid,
            in_specs=in_specs,
            out_specs=out_specs,
        ),
        compiler_params=pltpu.CompilerParams(
            dimension_semantics=("parallel",),
        ),
    )
    recon_p, mulv_p = fn(x_p, eps_p, w1, b1, wml, bml, w3, b3, w4, b4)

    # Slice back to the true (unpadded) shapes.
    recon = recon_p[:B, :D_in]
    mu = mulv_p[:B, :L]
    logvar = mulv_p[:B, Lp:Lp + L]
    return recon, mu, logvar


def init_params(key, input_size, hidden_size, latent_size):
    """Deterministic init mimicking nn.Linear's U(-1/sqrt(fan_in), 1/sqrt(fan_in)).

    Weights are stored as [in_features, out_features] (transposed vs torch).
    """
    def linear(k, fan_in, fan_out):
        kw, kb = jax.random.split(k)
        bound = 1.0 / jnp.sqrt(fan_in)
        w = jax.random.uniform(kw, (fan_in, fan_out), jnp.float32, -bound, bound)
        b = jax.random.uniform(kb, (1, fan_out), jnp.float32, -bound, bound)
        return w, b

    k1, k21, k22, k3, k4 = jax.random.split(key, 5)
    w1, b1 = linear(k1, input_size, hidden_size)
    w21, b21 = linear(k21, hidden_size, latent_size)
    w22, b22 = linear(k22, hidden_size, latent_size)
    w3, b3 = linear(k3, latent_size, hidden_size)
    w4, b4 = linear(k4, hidden_size, input_size)
    return {
        "w1": w1, "b1": b1,
        "w21": w21, "b21": b21,
        "w22": w22, "b22": b22,
        "w3": w3, "b3": b3,
        "w4": w4, "b4": b4,
    }


def vae_forward_ref(x, eps, params):
    """Pure-JAX reference for correctness check."""
    h1 = jnp.tanh(x @ params["w1"] + params["b1"])
    mu = _selu(h1 @ params["w21"] + params["b21"])
    logvar = _selu(h1 @ params["w22"] + params["b22"])
    z = eps * jnp.exp(0.5 * logvar) + mu
    h3 = jnp.tanh(z @ params["w3"] + params["b3"])
    recon = jnp.tanh(h3 @ params["w4"] + params["b4"])
    return recon, mu, logvar


if __name__ == "__main__":
    key = jax.random.PRNGKey(0)
    k_params, k_x, k_eps = jax.random.split(key, 3)

    # Module-default hidden/latent sizes (400 / 20); batch big enough to give a
    # 128-row tile and a 2-step grid (both TensorCores on v7x).
    B, INPUT, HIDDEN, LATENT = 256, 64, 400, 20

    params = init_params(k_params, INPUT, HIDDEN, LATENT)
    x = jax.random.normal(k_x, (B, INPUT), jnp.float32)
    eps = jax.random.normal(k_eps, (B, LATENT), jnp.float32)

    recon, mu, logvar = vae_forward(x, eps, params, batch_tile=128)
    jax.block_until_ready((recon, mu, logvar))

    # Verify against the pure-JAX reference.
    r_ref, mu_ref, lv_ref = vae_forward_ref(x, eps, params)
    assert jnp.allclose(recon, r_ref, atol=1e-4, rtol=1e-4)
    assert jnp.allclose(mu, mu_ref, atol=1e-4, rtol=1e-4)
    assert jnp.allclose(logvar, lv_ref, atol=1e-4, rtol=1e-4)

    print("KERNEL_OK")
</pallas_src>

<mosaic_0001>
module attributes {stable_mosaic.version = 11 : i64} {
  func.func @_vae_kernel(%arg0: i32, %arg1: memref<128x128xf32, #tpu.memory_space<vmem>>, %arg2: memref<128x128xf32, #tpu.memory_space<vmem>>, %arg3: memref<128x512xf32, #tpu.memory_space<vmem>>, %arg4: memref<1x512xf32, #tpu.memory_space<vmem>>, %arg5: memref<512x256xf32, #tpu.memory_space<vmem>>, %arg6: memref<1x256xf32, #tpu.memory_space<vmem>>, %arg7: memref<128x512xf32, #tpu.memory_space<vmem>>, %arg8: memref<1x512xf32, #tpu.memory_space<vmem>>, %arg9: memref<512x128xf32, #tpu.memory_space<vmem>>, %arg10: memref<1x128xf32, #tpu.memory_space<vmem>>, %arg11: memref<128x128xf32, #tpu.memory_space<vmem>>, %arg12: memref<128x256xf32, #tpu.memory_space<vmem>>) attributes {dimension_semantics = [#tpu.dimension_semantics<parallel>], iteration_bounds = array<i64: 2>, scalar_prefetch = 0 : i64, scratch_operands = 0 : i64, tpu.core_type = #tpu.core_type<tc>, window_params = [{transform_indices = @transform_0, window_bounds = array<i64: 128, 128>}, {transform_indices = @transform_1, window_bounds = array<i64: 128, 128>}, {pipeline_mode = #tpu.pipeline_mode<synchronous>, transform_indices = @transform_2, window_bounds = array<i64: 128, 512>}, {pipeline_mode = #tpu.pipeline_mode<synchronous>, transform_indices = @transform_3, window_bounds = array<i64: 1, 512>}, {pipeline_mode = #tpu.pipeline_mode<synchronous>, transform_indices = @transform_4, window_bounds = array<i64: 512, 256>}, {pipeline_mode = #tpu.pipeline_mode<synchronous>, transform_indices = @transform_5, window_bounds = array<i64: 1, 256>}, {pipeline_mode = #tpu.pipeline_mode<synchronous>, transform_indices = @transform_6, window_bounds = array<i64: 128, 512>}, {pipeline_mode = #tpu.pipeline_mode<synchronous>, transform_indices = @transform_7, window_bounds = array<i64: 1, 512>}, {pipeline_mode = #tpu.pipeline_mode<synchronous>, transform_indices = @transform_8, window_bounds = array<i64: 512, 128>}, {pipeline_mode = #tpu.pipeline_mode<synchronous>, transform_indices = @transform_9, window_bounds = array<i64: 1, 128>}, {transform_indices = @transform_10, window_bounds = array<i64: 128, 128>}, {transform_indices = @transform_11, window_bounds = array<i64: 128, 256>}]} {
    %c0 = arith.constant 0 : index
    %c0_0 = arith.constant 0 : index
    %0 = vector.load %arg1[%c0, %c0_0] : memref<128x128xf32, #tpu.memory_space<vmem>>, vector<128x128xf32>
    %c0_1 = arith.constant 0 : index
    %c0_2 = arith.constant 0 : index
    %1 = vector.load %arg3[%c0_1, %c0_2] : memref<128x512xf32, #tpu.memory_space<vmem>>, vector<128x512xf32>
    %cst = arith.constant dense<0.000000e+00> : vector<128x512xf32>
    %2 = tpu.matmul %0, %1, %cst {dimension_numbers = #tpu.dot_dimension_numbers<[1], [0], [0], [1], [0, 0, 1, 1], [], []>} : vector<128x128xf32>, vector<128x512xf32>, vector<128x512xf32> -> vector<128x512xf32>
    %c0_3 = arith.constant 0 : index
    %c0_4 = arith.constant 0 : index
    %3 = vector.load %arg4[%c0_3, %c0_4] : memref<1x512xf32, #tpu.memory_space<vmem>>, vector<1x512xf32>
    %4 = vector.broadcast %3 : vector<1x512xf32> to vector<128x512xf32>
    %5 = arith.addf %2, %4 : vector<128x512xf32>
    %6 = math.tanh %5 : vector<128x512xf32>
    %c0_5 = arith.constant 0 : index
    %c0_6 = arith.constant 0 : index
    %7 = vector.load %arg5[%c0_5, %c0_6] : memref<512x256xf32, #tpu.memory_space<vmem>>, vector<512x256xf32>
    %cst_7 = arith.constant dense<0.000000e+00> : vector<128x256xf32>
    %8 = tpu.matmul %6, %7, %cst_7 {dimension_numbers = #tpu.dot_dimension_numbers<[1], [0], [0], [1], [0, 0, 1, 1], [], []>} : vector<128x512xf32>, vector<512x256xf32>, vector<128x256xf32> -> vector<128x256xf32>
    %c0_8 = arith.constant 0 : index
    %c0_9 = arith.constant 0 : index
    %9 = vector.load %arg6[%c0_8, %c0_9] : memref<1x256xf32, #tpu.memory_space<vmem>>, vector<1x256xf32>
    %10 = vector.broadcast %9 : vector<1x256xf32> to vector<128x256xf32>
    %11 = arith.addf %8, %10 : vector<128x256xf32>
    %cst_10 = arith.constant 0.000000e+00 : f32
    %12 = vector.broadcast %cst_10 : f32 to vector<128x256xf32>
    %13 = arith.cmpf ogt, %11, %12 : vector<128x256xf32>
    %14 = math.exp %11 : vector<128x256xf32>
    %cst_11 = arith.constant 1.000000e+00 : f32
    %15 = vector.broadcast %cst_11 : f32 to vector<128x256xf32>
    %16 = arith.subf %14, %15 : vector<128x256xf32>
    %cst_12 = arith.constant 1.67326319 : f32
    %17 = vector.broadcast %cst_12 : f32 to vector<128x256xf32>
    %18 = arith.mulf %17, %16 : vector<128x256xf32>
    %19 = arith.select %13, %11, %18 : vector<128x256xi1>, vector<128x256xf32>
    %cst_13 = arith.constant 1.05070102 : f32
    %20 = vector.broadcast %cst_13 : f32 to vector<128x256xf32>
    %21 = arith.mulf %20, %19 : vector<128x256xf32>
    %22 = vector.extract_strided_slice %21 {offsets = [0, 0], sizes = [128, 128], strides = [1, 1]} : vector<128x256xf32> to vector<128x128xf32>
    %23 = vector.extract_strided_slice %21 {offsets = [0, 128], sizes = [128, 128], strides = [1, 1]} : vector<128x256xf32> to vector<128x128xf32>
    %c0_14 = arith.constant 0 : index
    %c0_15 = arith.constant 0 : index
    %24 = vector.load %arg2[%c0_14, %c0_15] : memref<128x128xf32, #tpu.memory_space<vmem>>, vector<128x128xf32>
    %cst_16 = arith.constant 5.000000e-01 : f32
    %25 = vector.broadcast %cst_16 : f32 to vector<128x128xf32>
    %26 = arith.mulf %25, %23 : vector<128x128xf32>
    %27 = math.exp %26 : vector<128x128xf32>
    %28 = arith.mulf %24, %27 : vector<128x128xf32>
    %29 = arith.addf %28, %22 : vector<128x128xf32>
    %c0_17 = arith.constant 0 : index
    %c0_18 = arith.constant 0 : index
    %30 = vector.load %arg7[%c0_17, %c0_18] : memref<128x512xf32, #tpu.memory_space<vmem>>, vector<128x512xf32>
    %cst_19 = arith.constant dense<0.000000e+00> : vector<128x512xf32>
    %31 = tpu.matmul %29, %30, %cst_19 {dimension_numbers = #tpu.dot_dimension_numbers<[1], [0], [0], [1], [0, 0, 1, 1], [], []>} : vector<128x128xf32>, vector<128x512xf32>, vector<128x512xf32> -> vector<128x512xf32>
    %c0_20 = arith.constant 0 : index
    %c0_21 = arith.constant 0 : index
    %32 = vector.load %arg8[%c0_20, %c0_21] : memref<1x512xf32, #tpu.memory_space<vmem>>, vector<1x512xf32>
    %33 = vector.broadcast %32 : vector<1x512xf32> to vector<128x512xf32>
    %34 = arith.addf %31, %33 : vector<128x512xf32>
    %35 = math.tanh %34 : vector<128x512xf32>
    %c0_22 = arith.constant 0 : index
    %c0_23 = arith.constant 0 : index
    %36 = vector.load %arg9[%c0_22, %c0_23] : memref<512x128xf32, #tpu.memory_space<vmem>>, vector<512x128xf32>
    %cst_24 = arith.constant dense<0.000000e+00> : vector<128x128xf32>
    %37 = tpu.matmul %35, %36, %cst_24 {dimension_numbers = #tpu.dot_dimension_numbers<[1], [0], [0], [1], [0, 0, 1, 1], [], []>} : vector<128x512xf32>, vector<512x128xf32>, vector<128x128xf32> -> vector<128x128xf32>
    %c0_25 = arith.constant 0 : index
    %c0_26 = arith.constant 0 : index
    %38 = vector.load %arg10[%c0_25, %c0_26] : memref<1x128xf32, #tpu.memory_space<vmem>>, vector<1x128xf32>
    %39 = vector.broadcast %38 : vector<1x128xf32> to vector<128x128xf32>
    %40 = arith.addf %37, %39 : vector<128x128xf32>
    %41 = math.tanh %40 : vector<128x128xf32>
    %c0_27 = arith.constant 0 : index
    %c0_28 = arith.constant 0 : index
    %42 = vector.load %arg11[%c0_27, %c0_28] : memref<128x128xf32, #tpu.memory_space<vmem>>, vector<128x128xf32>
    tpu.vector_store %arg11[%c0_27, %c0_28], %41 {strides = array<i32>} : memref<128x128xf32, #tpu.memory_space<vmem>>, vector<128x128xf32>,
    %c0_29 = arith.constant 0 : index
    %c0_30 = arith.constant 0 : index
    %43 = vector.load %arg12[%c0_29, %c0_30] : memref<128x256xf32, #tpu.memory_space<vmem>>, vector<128x256xf32>
    tpu.vector_store %arg12[%c0_29, %c0_30], %21 {strides = array<i32>} : memref<128x256xf32, #tpu.memory_space<vmem>>, vector<128x256xf32>,
    return
  }
  func.func @transform_0(%arg0: i32) -> (i32, i32) {
    %c0_i32 = arith.constant 0 : i32
    %c0_i32_0 = arith.constant 0 : i32
    return %arg0, %c0_i32 : i32, i32
  }
  func.func @transform_1(%arg0: i32) -> (i32, i32) {
    %c0_i32 = arith.constant 0 : i32
    %c0_i32_0 = arith.constant 0 : i32
    return %arg0, %c0_i32 : i32, i32
  }
  func.func @transform_2(%arg0: i32) -> (i32, i32) {
    %c0_i32 = arith.constant 0 : i32
    %c0_i32_0 = arith.constant 0 : i32
    %c0_i32_1 = arith.constant 0 : i32
    return %c0_i32, %c0_i32_0 : i32, i32
  }
  func.func @transform_3(%arg0: i32) -> (i32, i32) {
    %c0_i32 = arith.constant 0 : i32
    %c0_i32_0 = arith.constant 0 : i32
    %c0_i32_1 = arith.constant 0 : i32
    return %c0_i32, %c0_i32_0 : i32, i32
  }
  func.func @transform_4(%arg0: i32) -> (i32, i32) {
    %c0_i32 = arith.constant 0 : i32
    %c0_i32_0 = arith.constant 0 : i32
    %c0_i32_1 = arith.constant 0 : i32
    return %c0_i32, %c0_i32_0 : i32, i32
  }
  func.func @transform_5(%arg0: i32) -> (i32, i32) {
    %c0_i32 = arith.constant 0 : i32
    %c0_i32_0 = arith.constant 0 : i32
    %c0_i32_1 = arith.constant 0 : i32
    return %c0_i32, %c0_i32_0 : i32, i32
  }
  func.func @transform_6(%arg0: i32) -> (i32, i32) {
    %c0_i32 = arith.constant 0 : i32
    %c0_i32_0 = arith.constant 0 : i32
    %c0_i32_1 = arith.constant 0 : i32
    return %c0_i32, %c0_i32_0 : i32, i32
  }
  func.func @transform_7(%arg0: i32) -> (i32, i32) {
    %c0_i32 = arith.constant 0 : i32
    %c0_i32_0 = arith.constant 0 : i32
    %c0_i32_1 = arith.constant 0 : i32
    return %c0_i32, %c0_i32_0 : i32, i32
  }
  func.func @transform_8(%arg0: i32) -> (i32, i32) {
    %c0_i32 = arith.constant 0 : i32
    %c0_i32_0 = arith.constant 0 : i32
    %c0_i32_1 = arith.constant 0 : i32
    return %c0_i32, %c0_i32_0 : i32, i32
  }
  func.func @transform_9(%arg0: i32) -> (i32, i32) {
    %c0_i32 = arith.constant 0 : i32
    %c0_i32_0 = arith.constant 0 : i32
    %c0_i32_1 = arith.constant 0 : i32
    return %c0_i32, %c0_i32_0 : i32, i32
  }
  func.func @transform_10(%arg0: i32) -> (i32, i32) {
    %c0_i32 = arith.constant 0 : i32
    %c0_i32_0 = arith.constant 0 : i32
    return %arg0, %c0_i32 : i32, i32
  }
  func.func @transform_11(%arg0: i32) -> (i32, i32) {
    %c0_i32 = arith.constant 0 : i32
    %c0_i32_0 = arith.constant 0 : i32
    return %arg0, %c0_i32 : i32, i32
  }
}

</mosaic_0001>

<llo_original>
// kernel: tpu_custom_call.1
$region0: #{tpu_custom_call.1}
  #allocation0 [shape = 'u32[]', space=smem, size = 0x4, offset = 0x4, fixed_abs, tag = 'smem constant byte address 0x4 - core index']
  #allocation1 [shape = 'u32[144,128]{1,0:T(1,128)}', space=vmem, size = 0x12000, scoped, tag = 'internal scratch']
  %s0 = inlined_call_operand.hbm [shape: f32[256,128], index: 0, kind: input, shape index: {}]
  %s1 = inlined_call_operand.hbm [shape: f32[256,128], index: 1, kind: input, shape index: {}]
  %s2 = inlined_call_operand.hbm [shape: f32[128,512], index: 2, kind: input, shape index: {}]
  %s3 = inlined_call_operand.vmem [shape: f32[1,512], index: 3, kind: input, shape index: {}]
  %s4 = inlined_call_operand.hbm [shape: f32[512,256], index: 4, kind: input, shape index: {}]
  %s5 = inlined_call_operand.vmem [shape: f32[1,256], index: 5, kind: input, shape index: {}]
  %s6 = inlined_call_operand.hbm [shape: f32[128,512], index: 6, kind: input, shape index: {}]
  %s7 = inlined_call_operand.vmem [shape: f32[1,512], index: 7, kind: input, shape index: {}]
  %s8 = inlined_call_operand.hbm [shape: f32[512,128], index: 8, kind: input, shape index: {}]
  %s9 = inlined_call_operand.vmem [shape: f32[1,128], index: 9, kind: input, shape index: {}]
  %s10 = inlined_call_operand.hbm [shape: f32[256,128], index: 10, kind: output, shape index: {0}]
  %s11 = inlined_call_operand.hbm [shape: f32[256,256], index: 11, kind: output, shape index: {1}]
  %12 = xla_tuple %s10, %s11
  %s13 = sld [smem:[#allocation0]]
  $region105: #{tpu_custom_call.1} parent=0
    _
  %s15 = ssub.s32 1, %s13
  %s16 = scalar_select 0, %s15, %s13
  $region1: #{tpu_custom_call.1} parent=0
    #allocation2 [shape = 'u8[131072]{0}', space=vmem, size = 0x20000, scoped, tag = 'input window, operand 0']
    #allocation3 [shape = 's32[2]{0}', space=sflag, size = 0x8, scoped, tag = 'scoped memory for tpu_custom_call.1']
    #allocation4 [shape = 's32[2]{0}', space=sflag, size = 0x8, scoped, tag = 'scoped memory for tpu_custom_call.1']
    #allocation5 [shape = 'u8[131072]{0}', space=vmem, size = 0x20000, scoped, tag = 'input window, operand 1']
    #allocation6 [shape = 's32[2]{0}', space=sflag, size = 0x8, scoped, tag = 'scoped memory for tpu_custom_call.1']
    #allocation7 [shape = 'u8[262144]{0}', space=vmem, size = 0x40000, scoped, tag = 'input window, operand 2, single buffered']
    #allocation8 [shape = 'u8[524288]{0}', space=vmem, size = 0x80000, scoped, tag = 'input window, operand 4, single buffered']
    #allocation9 [shape = 's32[1]{0}', space=sflag, size = 0x4, scoped, tag = 'scoped memory for tpu_custom_call.1']
    #allocation10 [shape = 'u8[262144]{0}', space=vmem, size = 0x40000, scoped, tag = 'input window, operand 6, single buffered']
    #allocation11 [shape = 'u8[262144]{0}', space=vmem, size = 0x40000, scoped, tag = 'input window, operand 8, single buffered']
    #allocation12 [shape = 's32[1]{0}', space=sflag, size = 0x4, scoped, tag = 'scoped memory for tpu_custom_call.1']
    #allocation13 [shape = 'u8[131072]{0}', space=vmem, size = 0x20000, scoped, tag = 'output window, operand 0']
    #allocation14 [shape = 'u8[262144]{0}', space=vmem, size = 0x40000, scoped, tag = 'output window, operand 1']
    #allocation15 [shape = 's32[2]{0}', space=sflag, size = 0x8, scoped, tag = 'scoped memory for tpu_custom_call.1']
    %17 = vsyncpa [#allocation3], 0
    %s18 = scalar_lea.sflag [#allocation3], 1
    %19 = vsyncpa %s18, 0
    %20 = vsyncpa [#allocation6], 0
    %s21 = scalar_lea.sflag [#allocation6], 1
    %22 = vsyncpa %s21, 0
    %23 = vsyncpa [#allocation9], 0
    %24 = vsyncpa [#allocation12], 0
    %25 = vsyncpa [#allocation4], 0
    %s26 = scalar_lea.sflag [#allocation4], 1
    %27 = vsyncpa %s26, 0
    %28 = vsyncpa [#allocation15], 0
    %s29 = scalar_lea.sflag [#allocation15], 1
    %30 = vsyncpa %s29, 0
    loop: start=0, step=1, limit=4
    $region2: #{tpu_custom_call.1} parent=1 // loop_pre_header
      _
    $region3: #{tpu_custom_call.1} parent=1 // loop_header
      %s32 = sphi 0, %s36
      %p33 = scmp.ge.s32.totalorder %s32, 4
      %s42 = sphi 0, %s44
      %s45 = sphi 0, %s42
      %s46 = sphi 0, %s45
      %s62 = sphi 0, %s46
      %s68 = sphi 0, %s70
      %s71 = sphi 0, %s68
      %s72 = sphi 0, %s71
      %s88 = sphi 0, %s72
      %s92 = sphi 0, %s92
      %s94 = sphi 0, %s92
      %s95 = sphi 0, %s94
      %s109 = sphi 0, %s95
      %s113 = sphi 0, %s113
      %s115 = sphi 0, %s113
      %s116 = sphi 0, %s115
      %s130 = sphi 0, %s116
      %s134 = sphi 0, %s134
      %s136 = sphi 0, %s134
      %s137 = sphi 0, %s136
      %s151 = sphi 0, %s137
      %s155 = sphi 0, %s155
      %s157 = sphi 0, %s155
      %s158 = sphi 0, %s157
      %s172 = sphi 0, %s158
      %s176 = sphi 0, %s176
      %s178 = sphi 0, %s176
      %s179 = sphi 0, %s178
      %s193 = sphi 0, %s179
      %s197 = sphi 0, %s197
      %s199 = sphi 0, %s197
      %s200 = sphi 0, %s199
      %s214 = sphi 0, %s200
      %s218 = sphi 0, %s218
      %s220 = sphi 0, %s218
      %s221 = sphi 0, %s220
      %s235 = sphi 0, %s221
      %s239 = sphi 0, %s239
      %s241 = sphi 0, %s239
      %s242 = sphi 0, %s241
      %s256 = sphi 0, %s242
      %s262 = sphi 0, %s264
      %s265 = sphi 0, %s262
      %s266 = sphi 0, %s265
      %s282 = sphi 0, %s266
      %s288 = sphi 0, %s290
      %s291 = sphi 0, %s288
      %s292 = sphi 0, %s291
      %s308 = sphi 0, %s292
    $region4: #{tpu_custom_call.1} parent=1 // loop_header_branch
      %35 = sbr.rel (%p33) target = $region8
    $region5: #{tpu_custom_call.1} parent=1 // loop_body
      %s37 = ssub.s32 %s32, 1
      %s38 = ssub.s32 %s32, 2
      %s39 = sadd.s32 %s32, 1
      %s40 = ssub.s32 %s32, %s39
      %p41 = scmp.eq.s32.totalorder %s40, 0
      %s43 = sadd.s32 %s42, 1
      %s44 = scalar_select %p41, %s42, %s43
      %p47 = pneg %p41
      %p48 = scmp.eq.s32.totalorder %s32, 1
      %p49 = por %p47, %p48
      %p50 = scmp.ne.s32.totalorder %s42, %s45
      %p51 = scmp.eq.s32.totalorder %s32, 0
      %p52 = por %p50, %p51
      %p53 = scmp.ne.s32.totalorder %s42, %s45
      %p54 = scmp.eq.s32.totalorder %s37, 1
      %p55 = por %p53, %p54
      %p56 = scmp.ne.s32.totalorder %s45, %s46
      %p57 = scmp.eq.s32.totalorder %s37, 0
      %p58 = por %p56, %p57
      %p59 = scmp.ne.s32.totalorder %s45, %s46
      %p60 = scmp.eq.s32.totalorder %s38, 1
      %p61 = por %p59, %p60
      %p63 = scmp.ne.s32.totalorder %s46, %s62
      %p64 = scmp.eq.s32.totalorder %s38, 0
      %p65 = por %p63, %p64
      %s66 = ssub.s32 %s32, %s39
      %p67 = scmp.eq.s32.totalorder %s66, 0
      %s69 = sadd.s32 %s68, 1
      %s70 = scalar_select %p67, %s68, %s69
      %p73 = pneg %p67
      %p74 = scmp.eq.s32.totalorder %s32, 1
      %p75 = por %p73, %p74
      %p76 = scmp.ne.s32.totalorder %s68, %s71
      %p77 = scmp.eq.s32.totalorder %s32, 0
      %p78 = por %p76, %p77
      %p79 = scmp.ne.s32.totalorder %s68, %s71
      %p80 = scmp.eq.s32.totalorder %s37, 1
      %p81 = por %p79, %p80
      %p82 = scmp.ne.s32.totalorder %s71, %s72
      %p83 = scmp.eq.s32.totalorder %s37, 0
      %p84 = por %p82, %p83
      %p85 = scmp.ne.s32.totalorder %s71, %s72
      %p86 = scmp.eq.s32.totalorder %s38, 1
      %p87 = por %p85, %p86
      %p89 = scmp.ne.s32.totalorder %s72, %s88
      %p90 = scmp.eq.s32.totalorder %s38, 0
      %p91 = por %p89, %p90
      %s93 = sadd.s32 %s92, 1
      %p96 = scmp.eq.s32.totalorder %s32, 1
      %p97 = scmp.ne.s32.totalorder %s92, %s94
      %p98 = scmp.eq.s32.totalorder %s32, 0
      %p99 = por %p97, %p98
      %p100 = scmp.ne.s32.totalorder %s92, %s94
      %p101 = scmp.eq.s32.totalorder %s37, 1
      %p102 = por %p100, %p101
      %p103 = scmp.ne.s32.totalorder %s94, %s95
      %p104 = scmp.eq.s32.totalorder %s37, 0
      %p105 = por %p103, %p104
      %p106 = scmp.ne.s32.totalorder %s94, %s95
      %p107 = scmp.eq.s32.totalorder %s38, 1
      %p108 = por %p106, %p107
      %p110 = scmp.ne.s32.totalorder %s95, %s109
      %p111 = scmp.eq.s32.totalorder %s38, 0
      %p112 = por %p110, %p111
      %s114 = sadd.s32 %s113, 1
      %p117 = scmp.eq.s32.totalorder %s32, 1
      %p118 = scmp.ne.s32.totalorder %s113, %s115
      %p119 = scmp.eq.s32.totalorder %s32, 0
      %p120 = por %p118, %p119
      %p121 = scmp.ne.s32.totalorder %s113, %s115
      %p122 = scmp.eq.s32.totalorder %s37, 1
      %p123 = por %p121, %p122
      %p124 = scmp.ne.s32.totalorder %s115, %s116
      %p125 = scmp.eq.s32.totalorder %s37, 0
      %p126 = por %p124, %p125
      %p127 = scmp.ne.s32.totalorder %s115, %s116
      %p128 = scmp.eq.s32.totalorder %s38, 1
      %p129 = por %p127, %p128
      %p131 = scmp.ne.s32.totalorder %s116, %s130
      %p132 = scmp.eq.s32.totalorder %s38, 0
      %p133 = por %p131, %p132
      %s135 = sadd.s32 %s134, 1
      %p138 = scmp.eq.s32.totalorder %s32, 1
      %p139 = scmp.ne.s32.totalorder %s134, %s136
      %p140 = scmp.eq.s32.totalorder %s32, 0
      %p141 = por %p139, %p140
      %p142 = scmp.ne.s32.totalorder %s134, %s136
      %p143 = scmp.eq.s32.totalorder %s37, 1
      %p144 = por %p142, %p143
      %p145 = scmp.ne.s32.totalorder %s136, %s137
      %p146 = scmp.eq.s32.totalorder %s37, 0
      %p147 = por %p145, %p146
      %p148 = scmp.ne.s32.totalorder %s136, %s137
      %p149 = scmp.eq.s32.totalorder %s38, 1
      %p150 = por %p148, %p149
      %p152 = scmp.ne.s32.totalorder %s137, %s151
      %p153 = scmp.eq.s32.totalorder %s38, 0
      %p154 = por %p152, %p153
      %s156 = sadd.s32 %s155, 1
      %p159 = scmp.eq.s32.totalorder %s32, 1
      %p160 = scmp.ne.s32.totalorder %s155, %s157
      %p161 = scmp.eq.s32.totalorder %s32, 0
      %p162 = por %p160, %p161
      %p163 = scmp.ne.s32.totalorder %s155, %s157
      %p164 = scmp.eq.s32.totalorder %s37, 1
      %p165 = por %p163, %p164
      %p166 = scmp.ne.s32.totalorder %s157, %s158
      %p167 = scmp.eq.s32.totalorder %s37, 0
      %p168 = por %p166, %p167
      %p169 = scmp.ne.s32.totalorder %s157, %s158
      %p170 = scmp.eq.s32.totalorder %s38, 1
      %p171 = por %p169, %p170
      %p173 = scmp.ne.s32.totalorder %s158, %s172
      %p174 = scmp.eq.s32.totalorder %s38, 0
      %p175 = por %p173, %p174
      %s177 = sadd.s32 %s176, 1
      %p180 = scmp.eq.s32.totalorder %s32, 1
      %p181 = scmp.ne.s32.totalorder %s176, %s178
      %p182 = scmp.eq.s32.totalorder %s32, 0
      %p183 = por %p181, %p182
      %p184 = scmp.ne.s32.totalorder %s176, %s178
      %p185 = scmp.eq.s32.totalorder %s37, 1
      %p186 = por %p184, %p185
      %p187 = scmp.ne.s32.totalorder %s178, %s179
      %p188 = scmp.eq.s32.totalorder %s37, 0
      %p189 = por %p187, %p188
      %p190 = scmp.ne.s32.totalorder %s178, %s179
      %p191 = scmp.eq.s32.totalorder %s38, 1
      %p192 = por %p190, %p191
      %p194 = scmp.ne.s32.totalorder %s179, %s193
      %p195 = scmp.eq.s32.totalorder %s38, 0
      %p196 = por %p194, %p195
      %s198 = sadd.s32 %s197, 1
      %p201 = scmp.eq.s32.totalorder %s32, 1
      %p202 = scmp.ne.s32.totalorder %s197, %s199
      %p203 = scmp.eq.s32.totalorder %s32, 0
      %p204 = por %p202, %p203
      %p205 = scmp.ne.s32.totalorder %s197, %s199
      %p206 = scmp.eq.s32.totalorder %s37, 1
      %p207 = por %p205, %p206
      %p208 = scmp.ne.s32.totalorder %s199, %s200
      %p209 = scmp.eq.s32.totalorder %s37, 0
      %p210 = por %p208, %p209
      %p211 = scmp.ne.s32.totalorder %s199, %s200
      %p212 = scmp.eq.s32.totalorder %s38, 1
      %p213 = por %p211, %p212
      %p215 = scmp.ne.s32.totalorder %s200, %s214
      %p216 = scmp.eq.s32.totalorder %s38, 0
      %p217 = por %p215, %p216
      %s219 = sadd.s32 %s218, 1
      %p222 = scmp.eq.s32.totalorder %s32, 1
      %p223 = scmp.ne.s32.totalorder %s218, %s220
      %p224 = scmp.eq.s32.totalorder %s32, 0
      %p225 = por %p223, %p224
      %p226 = scmp.ne.s32.totalorder %s218, %s220
      %p227 = scmp.eq.s32.totalorder %s37, 1
      %p228 = por %p226, %p227
      %p229 = scmp.ne.s32.totalorder %s220, %s221
      %p230 = scmp.eq.s32.totalorder %s37, 0
      %p231 = por %p229, %p230
      %p232 = scmp.ne.s32.totalorder %s220, %s221
      %p233 = scmp.eq.s32.totalorder %s38, 1
      %p234 = por %p232, %p233
      %p236 = scmp.ne.s32.totalorder %s221, %s235
      %p237 = scmp.eq.s32.totalorder %s38, 0
      %p238 = por %p236, %p237
      %s240 = sadd.s32 %s239, 1
      %p243 = scmp.eq.s32.totalorder %s32, 1
      %p244 = scmp.ne.s32.totalorder %s239, %s241
      %p245 = scmp.eq.s32.totalorder %s32, 0
      %p246 = por %p244, %p245
      %p247 = scmp.ne.s32.totalorder %s239, %s241
      %p248 = scmp.eq.s32.totalorder %s37, 1
      %p249 = por %p247, %p248
      %p250 = scmp.ne.s32.totalorder %s241, %s242
      %p251 = scmp.eq.s32.totalorder %s37, 0
      %p252 = por %p250, %p251
      %p253 = scmp.ne.s32.totalorder %s241, %s242
      %p254 = scmp.eq.s32.totalorder %s38, 1
      %p255 = por %p253, %p254
      %p257 = scmp.ne.s32.totalorder %s242, %s256
      %p258 = scmp.eq.s32.totalorder %s38, 0
      %p259 = por %p257, %p258
      %s260 = ssub.s32 %s32, %s39
      %p261 = scmp.eq.s32.totalorder %s260, 0
      %s263 = sadd.s32 %s262, 1
      %s264 = scalar_select %p261, %s262, %s263
      %p267 = pneg %p261
      %p268 = scmp.eq.s32.totalorder %s32, 1
      %p269 = por %p267, %p268
      %p270 = scmp.ne.s32.totalorder %s262, %s265
      %p271 = scmp.eq.s32.totalorder %s32, 0
      %p272 = por %p270, %p271
      %p273 = scmp.ne.s32.totalorder %s262, %s265
      %p274 = scmp.eq.s32.totalorder %s37, 1
      %p275 = por %p273, %p274
      %p276 = scmp.ne.s32.totalorder %s265, %s266
      %p277 = scmp.eq.s32.totalorder %s37, 0
      %p278 = por %p276, %p277
      %p279 = scmp.ne.s32.totalorder %s265, %s266
      %p280 = scmp.eq.s32.totalorder %s38, 1
      %p281 = por %p279, %p280
      %p283 = scmp.ne.s32.totalorder %s266, %s282
      %p284 = scmp.eq.s32.totalorder %s38, 0
      %p285 = por %p283, %p284
      %s286 = ssub.s32 %s32, %s39
      %p287 = scmp.eq.s32.totalorder %s286, 0
      %s289 = sadd.s32 %s288, 1
      %s290 = scalar_select %p287, %s288, %s289
      %p293 = pneg %p287
      %p294 = scmp.eq.s32.totalorder %s32, 1
      %p295 = por %p293, %p294
      %p296 = scmp.ne.s32.totalorder %s288, %s291
      %p297 = scmp.eq.s32.totalorder %s32, 0
      %p298 = por %p296, %p297
      %p299 = scmp.ne.s32.totalorder %s288, %s291
      %p300 = scmp.eq.s32.totalorder %s37, 1
      %p301 = por %p299, %p300
      %p302 = scmp.ne.s32.totalorder %s291, %s292
      %p303 = scmp.eq.s32.totalorder %s37, 0
      %p304 = por %p302, %p303
      %p305 = scmp.ne.s32.totalorder %s291, %s292
      %p306 = scmp.eq.s32.totalorder %s38, 1
      %p307 = por %p305, %p306
      %p309 = scmp.ne.s32.totalorder %s292, %s308
      %p310 = scmp.eq.s32.totalorder %s38, 0
      %p311 = por %p309, %p310
      %p312 = scmp.le.s32.totalorder 1, %s32
      %p313 = scmp.lt.s32.totalorder %s32, 3
      %p314 = pnand %p312, %p313
      %p315 = pneg %p314
      // Predicated region
      $region9: #{tpu_custom_call.1} parent=5 // pred_check
        _
      $region10: #{tpu_custom_call.1} parent=5 // pred_check_branch
        %317 = sbr.rel (%p314) target = $region12
      $region11: #{tpu_custom_call.1} parent=5 // pred_region
        %s318 = ssub.s32 %s32, 1
        // Predicated region
        $region13: #{tpu_custom_call.1} parent=11 // pred_check
          %p319 = pneg %p105
        $region14: #{tpu_custom_call.1} parent=11 // pred_check_branch
          %321 = sbr.rel (%p319) target = $region16
        $region15: #{tpu_custom_call.1} parent=11 // pred_region
          %s323 = ssub.s32 8192, 8192
          %324 = vsyncadd [#allocation6], %s323
          %s325 = sshll.u32 [#allocation7], 4
          %s326 = int_to_ptr.vmem [resolvable:$true] %s325
          %331 = dma.hbm_to_vmem [thread:$0]  %s2, 8192, %s326, [#allocation6], 512, 512, 32
        $region16: #{tpu_custom_call.1} parent=11 // pred_fallthru
          _
        // Predicated region
        $region17: #{tpu_custom_call.1} parent=11 // pred_check
          %p332 = pneg %p126
        $region18: #{tpu_custom_call.1} parent=11 // pred_check_branch
          %334 = sbr.rel (%p332) target = $region20
        $region19: #{tpu_custom_call.1} parent=11 // pred_region
          _
        $region20: #{tpu_custom_call.1} parent=11 // pred_fallthru
          _
        // Predicated region
        $region21: #{tpu_custom_call.1} parent=11 // pred_check
          %p335 = pneg %p147
        $region22: #{tpu_custom_call.1} parent=11 // pred_check_branch
          %337 = sbr.rel (%p335) target = $region24
        $region23: #{tpu_custom_call.1} parent=11 // pred_region
          %s339 = ssub.s32 16384, 16384
          %340 = vsyncadd [#allocation9], %s339
          %s341 = sshll.u32 [#allocation8], 4
          %s342 = int_to_ptr.vmem [resolvable:$true] %s341
          %347 = dma.hbm_to_vmem [thread:$0]  %s4, 16384, %s342, [#allocation9], 256, 256, 16
        $region24: #{tpu_custom_call.1} parent=11 // pred_fallthru
          _
        // Predicated region
        $region25: #{tpu_custom_call.1} parent=11 // pred_check
          %p348 = pneg %p168
        $region26: #{tpu_custom_call.1} parent=11 // pred_check_branch
          %350 = sbr.rel (%p348) target = $region28
        $region27: #{tpu_custom_call.1} parent=11 // pred_region
          _
        $region28: #{tpu_custom_call.1} parent=11 // pred_fallthru
          _
        // Predicated region
        $region29: #{tpu_custom_call.1} parent=11 // pred_check
          %p351 = pneg %p189
        $region30: #{tpu_custom_call.1} parent=11 // pred_check_branch
          %353 = sbr.rel (%p351) target = $region32
        $region31: #{tpu_custom_call.1} parent=11 // pred_region
          %s355 = ssub.s32 8192, 8192
          %356 = vsyncadd [#allocation9], %s355
          %s357 = sshll.u32 [#allocation10], 4
          %s358 = int_to_ptr.vmem [resolvable:$true] %s357
          %363 = dma.hbm_to_vmem [thread:$0]  %s6, 8192, %s358, [#allocation9], 512, 512, 32
        $region32: #{tpu_custom_call.1} parent=11 // pred_fallthru
          _
        // Predicated region
        $region33: #{tpu_custom_call.1} parent=11 // pred_check
          %p364 = pneg %p210
        $region34: #{tpu_custom_call.1} parent=11 // pred_check_branch
          %366 = sbr.rel (%p364) target = $region36
        $region35: #{tpu_custom_call.1} parent=11 // pred_region
          _
        $region36: #{tpu_custom_call.1} parent=11 // pred_fallthru
          _
        // Predicated region
        $region37: #{tpu_custom_call.1} parent=11 // pred_check
          %p367 = pneg %p231
        $region38: #{tpu_custom_call.1} parent=11 // pred_check_branch
          %369 = sbr.rel (%p367) target = $region40
        $region39: #{tpu_custom_call.1} parent=11 // pred_region
          %s371 = ssub.s32 8192, 8192
          %372 = vsyncadd [#allocation12], %s371
          %s373 = sshll.u32 [#allocation11], 4
          %s374 = int_to_ptr.vmem [resolvable:$true] %s373
          %379 = dma.hbm_to_vmem [thread:$0]  %s8, 8192, %s374, [#allocation12], 128, 128, 8
        $region40: #{tpu_custom_call.1} parent=11 // pred_fallthru
          _
        // Predicated region
        $region41: #{tpu_custom_call.1} parent=11 // pred_check
          %p380 = pneg %p252
        $region42: #{tpu_custom_call.1} parent=11 // pred_check_branch
          %382 = sbr.rel (%p380) target = $region44
        $region43: #{tpu_custom_call.1} parent=11 // pred_region
          _
        $region44: #{tpu_custom_call.1} parent=11 // pred_fallthru
          _
      $region12: #{tpu_custom_call.1} parent=5 // pred_fallthru
        _
      %p383 = scmp.lt.s32.totalorder %s32, 2
      // Predicated region
      $region45: #{tpu_custom_call.1} parent=5 // pred_check
        %p384 = pneg %p383
      $region46: #{tpu_custom_call.1} parent=5 // pred_check_branch
        %386 = sbr.rel (%p384) target = $region48
      $region47: #{tpu_custom_call.1} parent=5 // pred_region
        // Predicated region
        $region49: #{tpu_custom_call.1} parent=47 // pred_check
          %p387 = pneg %p52
        $region50: #{tpu_custom_call.1} parent=47 // pred_check_branch
          %389 = sbr.rel (%p387) target = $region52
        $region51: #{tpu_custom_call.1} parent=47 // pred_region
          %s390 = sand.u32 %s42, 1
          %s391 = scalar_lea.sflag [#allocation3], %s390
          %s392 = sand.u32 %s42, 1
          %s393 = smul.addr %s392, 128
          %s394 = scalar_lea.vmem [#allocation2], %s393
          %s395 = smul.u32 16, %s32
          %s397 = ssub.s32 2048, 2048
          %398 = vsyncadd %s391, %s397
          %s399 = smul.addr %s395, 128
          %s400 = scalar_lea.hbm %s0, %s399
          %s401 = sshll.u32 %s394, 4
          %s402 = int_to_ptr.vmem [resolvable:$true] %s401
          %407 = dma.hbm_to_vmem [thread:$0]  %s400, 2048, %s402, %s391, 128, 128, 8
        $region52: #{tpu_custom_call.1} parent=47 // pred_fallthru
          _
        // Predicated region
        $region53: #{tpu_custom_call.1} parent=47 // pred_check
          %p408 = pneg %p78
        $region54: #{tpu_custom_call.1} parent=47 // pred_check_branch
          %410 = sbr.rel (%p408) target = $region56
        $region55: #{tpu_custom_call.1} parent=47 // pred_region
          %s411 = sand.u32 %s32, 1
          %s412 = scalar_lea.sflag [#allocation6], %s411
          %s413 = sand.u32 %s68, 1
          %s414 = smul.addr %s413, 128
          %s415 = scalar_lea.vmem [#allocation5], %s414
          %s416 = smul.u32 16, %s32
          %s418 = ssub.s32 2048, 2048
          %419 = vsyncadd %s412, %s418
          %s420 = smul.addr %s416, 128
          %s421 = scalar_lea.hbm %s1, %s420
          %s422 = sshll.u32 %s415, 4
          %s423 = int_to_ptr.vmem [resolvable:$true] %s422
          %428 = dma.hbm_to_vmem [thread:$0]  %s421, 2048, %s423, %s412, 128, 128, 8
        $region56: #{tpu_custom_call.1} parent=47 // pred_fallthru
          _
      $region48: #{tpu_custom_call.1} parent=5 // pred_fallthru
        _
      %p429 = scmp.le.s32.totalorder 1, %s32
      %p430 = scmp.lt.s32.totalorder %s32, 3
      %p431 = pnand %p429, %p430
      %p432 = pneg %p431
      // Predicated region
      $region57: #{tpu_custom_call.1} parent=5 // pred_check
        _
      $region58: #{tpu_custom_call.1} parent=5 // pred_check_branch
        %434 = sbr.rel (%p431) target = $region60
      $region59: #{tpu_custom_call.1} parent=5 // pred_region
        %s435 = ssub.s32 %s32, 1
        %s436 = sand.u32 %s45, 1
        %s437 = scalar_lea.sflag [#allocation3], %s436
        %s438 = sand.u32 %s45, 1
        %s439 = smul.addr %s438, 128
        %s440 = scalar_lea.vmem [#allocation2], %s439
        // Predicated region
        $region61: #{tpu_custom_call.1} parent=59 // pred_check
          %p441 = pneg %p58
        $region62: #{tpu_custom_call.1} parent=59 // pred_check_branch
          %443 = sbr.rel (%p441) target = $region64
        $region63: #{tpu_custom_call.1} parent=59 // pred_region
          %444 = dma.done %s437, 2048
        $region64: #{tpu_custom_call.1} parent=59 // pred_fallthru
          _
        %s445 = sand.u32 %s37, 1
        %s446 = scalar_lea.sflag [#allocation6], %s445
        %s447 = sand.u32 %s71, 1
        %s448 = smul.addr %s447, 128
        %s449 = scalar_lea.vmem [#allocation5], %s448
        // Predicated region
        $region65: #{tpu_custom_call.1} parent=59 // pred_check
          %p450 = pneg %p84
        $region66: #{tpu_custom_call.1} parent=59 // pred_check_branch
          %452 = sbr.rel (%p450) target = $region68
        $region67: #{tpu_custom_call.1} parent=59 // pred_region
          %453 = dma.done %s446, 2048
        $region68: #{tpu_custom_call.1} parent=59 // pred_fallthru
          _
        // Predicated region
        $region69: #{tpu_custom_call.1} parent=59 // pred_check
          %p454 = pneg %p105
        $region70: #{tpu_custom_call.1} parent=59 // pred_check_branch
          %456 = sbr.rel (%p454) target = $region72
        $region71: #{tpu_custom_call.1} parent=59 // pred_region
          %457 = dma.done [#allocation6], 8192
        $region72: #{tpu_custom_call.1} parent=59 // pred_fallthru
          _
        // Predicated region
        $region73: #{tpu_custom_call.1} parent=59 // pred_check
          %p458 = pneg %p147
        $region74: #{tpu_custom_call.1} parent=59 // pred_check_branch
          %460 = sbr.rel (%p458) target = $region76
        $region75: #{tpu_custom_call.1} parent=59 // pred_region
          %461 = dma.done [#allocation9], 16384
        $region76: #{tpu_custom_call.1} parent=59 // pred_fallthru
          _
        // Predicated region
        $region77: #{tpu_custom_call.1} parent=59 // pred_check
          %p462 = pneg %p189
        $region78: #{tpu_custom_call.1} parent=59 // pred_check_branch
          %464 = sbr.rel (%p462) target = $region80
        $region79: #{tpu_custom_call.1} parent=59 // pred_region
          %465 = dma.done [#allocation9], 8192
        $region80: #{tpu_custom_call.1} parent=59 // pred_fallthru
          _
        // Predicated region
        $region81: #{tpu_custom_call.1} parent=59 // pred_check
          %p466 = pneg %p231
        $region82: #{tpu_custom_call.1} parent=59 // pred_check_branch
          %468 = sbr.rel (%p466) target = $region84
        $region83: #{tpu_custom_call.1} parent=59 // pred_region
          %469 = dma.done [#allocation12], 8192
        $region84: #{tpu_custom_call.1} parent=59 // pred_fallthru
          _
        %s470 = sand.u32 %s45, 1
        %s471 = scalar_lea.sflag [#allocation3], %s470
        %s472 = sand.u32 %s45, 1
        %s473 = smul.addr %s472, 128
        %s474 = scalar_lea.vmem [#allocation2], %s473
        %p475 = pneg %p58
        %p476 = pneg %p55
        %s477 = sand.u32 %s37, 1
        %s478 = scalar_lea.sflag [#allocation6], %s477
        %s479 = sand.u32 %s71, 1
        %s480 = smul.addr %s479, 128
        %s481 = scalar_lea.vmem [#allocation5], %s480
        %p482 = pneg %p84
        %p483 = pneg %p81
        %p484 = pneg %p105
        %p485 = pneg %p102
        %p486 = pneg %p126
        %p487 = pneg %p123
        %p488 = pneg %p147
        %p489 = pneg %p144
        %p490 = pneg %p168
        %p491 = pneg %p165
        %p492 = pneg %p189
        %p493 = pneg %p186
        %p494 = pneg %p210
        %p495 = pneg %p207
        %p496 = pneg %p231
        %p497 = pneg %p228
        %p498 = pneg %p252
        %p499 = pneg %p249
        %p500 = pneg %p278
        %p501 = pneg %p275
        %s502 = sand.u32 %s265, 1
        %s503 = scalar_lea.sflag [#allocation4], %s502
        %s504 = sand.u32 %s265, 1
        %s505 = smul.addr %s504, 128
        %s506 = scalar_lea.vmem [#allocation13], %s505
        %p507 = pneg %p304
        %p508 = pneg %p301
        %s509 = sand.u32 %s291, 1
        %s510 = scalar_lea.sflag [#allocation15], %s509
        %s511 = sand.u32 %s291, 1
        %s512 = smul.addr %s511, 256
        %s513 = scalar_lea.vmem [#allocation14], %s512
        %s514 = smul.u32 16, %s37
        %s515 = smul.u32 16, %s37
        %s516 = smul.u32 16, %s37
        %s517 = smul.u32 16, %s37
        %v518 = vld [vmem:[%s440] sm:$0xff]
        %v519 = vld [vmem:[%s440 + $0x8] sm:$0xff]
        %v520 = vld [vmem:[%s440 + $0x10] sm:$0xff]
        %v521 = vld [vmem:[%s440 + $0x18] sm:$0xff]
        %v522 = vld [vmem:[%s440 + $0x20] sm:$0xff]
        %v523 = vld [vmem:[%s440 + $0x28] sm:$0xff]
        %v524 = vld [vmem:[%s440 + $0x30] sm:$0xff]
        %v525 = vld [vmem:[%s440 + $0x38] sm:$0xff]
        %v526 = vld [vmem:[%s440 + $0x40] sm:$0xff]
        %v527 = vld [vmem:[%s440 + $0x48] sm:$0xff]
        %v528 = vld [vmem:[%s440 + $0x50] sm:$0xff]
        %v529 = vld [vmem:[%s440 + $0x58] sm:$0xff]
        %v530 = vld [vmem:[%s440 + $0x60] sm:$0xff]
        %v531 = vld [vmem:[%s440 + $0x68] sm:$0xff]
        %v532 = vld [vmem:[%s440 + $0x70] sm:$0xff]
        %v533 = vld [vmem:[%s440 + $0x78] sm:$0xff]
        %v534 = vld [vmem:[#allocation7] sm:$0xff]
        %v535 = vld [vmem:[#allocation7 + $0x8] sm:$0xff]
        %v536 = vld [vmem:[#allocation7 + $0x10] sm:$0xff]
        %v537 = vld [vmem:[#allocation7 + $0x18] sm:$0xff]
        %v538 = vld [vmem:[#allocation7 + $0x20] sm:$0xff]
        %v539 = vld [vmem:[#allocation7 + $0x28] sm:$0xff]
        %v540 = vld [vmem:[#allocation7 + $0x30] sm:$0xff]
        %v541 = vld [vmem:[#allocation7 + $0x38] sm:$0xff]
        %v542 = vld [vmem:[#allocation7 + $0x40] sm:$0xff]
        %v543 = vld [vmem:[#allocation7 + $0x48] sm:$0xff]
        %v544 = vld [vmem:[#allocation7 + $0x50] sm:$0xff]
        %v545 = vld [vmem:[#allocation7 + $0x58] sm:$0xff]
        %v546 = vld [vmem:[#allocation7 + $0x60] sm:$0xff]
        %v547 = vld [vmem:[#allocation7 + $0x68] sm:$0xff]
        %v548 = vld [vmem:[#allocation7 + $0x70] sm:$0xff]
        %v549 = vld [vmem:[#allocation7 + $0x78] sm:$0xff]
        %v550 = vld [vmem:[#allocation7 + $0x80] sm:$0xff]
        %v551 = vld [vmem:[#allocation7 + $0x88] sm:$0xff]
        %v552 = vld [vmem:[#allocation7 + $0x90] sm:$0xff]
        %v553 = vld [vmem:[#allocation7 + $0x98] sm:$0xff]
        %v554 = vld [vmem:[#allocation7 + $0xa0] sm:$0xff]
        %v555 = vld [vmem:[#allocation7 + $0xa8] sm:$0xff]
        %v556 = vld [vmem:[#allocation7 + $0xb0] sm:$0xff]
        %v557 = vld [vmem:[#allocation7 + $0xb8] sm:$0xff]
        %v558 = vld [vmem:[#allocation7 + $0xc0] sm:$0xff]
        %v559 = vld [vmem:[#allocation7 + $0xc8] sm:$0xff]
        %v560 = vld [vmem:[#allocation7 + $0xd0] sm:$0xff]
        %v561 = vld [vmem:[#allocation7 + $0xd8] sm:$0xff]
        %v562 = vld [vmem:[#allocation7 + $0xe0] sm:$0xff]
        %v563 = vld [vmem:[#allocation7 + $0xe8] sm:$0xff]
        %v564 = vld [vmem:[#allocation7 + $0xf0] sm:$0xff]
        %v565 = vld [vmem:[#allocation7 + $0xf8] sm:$0xff]
        %v566 = vld [vmem:[#allocation7 + $0x100] sm:$0xff]
        %v567 = vld [vmem:[#allocation7 + $0x108] sm:$0xff]
        %v568 = vld [vmem:[#allocation7 + $0x110] sm:$0xff]
        %v569 = vld [vmem:[#allocation7 + $0x118] sm:$0xff]
        %v570 = vld [vmem:[#allocation7 + $0x120] sm:$0xff]
        %v571 = vld [vmem:[#allocation7 + $0x128] sm:$0xff]
        %v572 = vld [vmem:[#allocation7 + $0x130] sm:$0xff]
        %v573 = vld [vmem:[#allocation7 + $0x138] sm:$0xff]
        %v574 = vld [vmem:[#allocation7 + $0x140] sm:$0xff]
        %v575 = vld [vmem:[#allocation7 + $0x148] sm:$0xff]
        %v576 = vld [vmem:[#allocation7 + $0x150] sm:$0xff]
        %v577 = vld [vmem:[#allocation7 + $0x158] sm:$0xff]
        %v578 = vld [vmem:[#allocation7 + $0x160] sm:$0xff]
        %v579 = vld [vmem:[#allocation7 + $0x168] sm:$0xff]
        %v580 = vld [vmem:[#allocation7 + $0x170] sm:$0xff]
        %v581 = vld [vmem:[#allocation7 + $0x178] sm:$0xff]
        %v582 = vld [vmem:[#allocation7 + $0x180] sm:$0xff]
        %v583 = vld [vmem:[#allocation7 + $0x188] sm:$0xff]
        %v584 = vld [vmem:[#allocation7 + $0x190] sm:$0xff]
        %v585 = vld [vmem:[#allocation7 + $0x198] sm:$0xff]
        %v586 = vld [vmem:[#allocation7 + $0x1a0] sm:$0xff]
        %v587 = vld [vmem:[#allocation7 + $0x1a8] sm:$0xff]
        %v588 = vld [vmem:[#allocation7 + $0x1b0] sm:$0xff]
        %v589 = vld [vmem:[#allocation7 + $0x1b8] sm:$0xff]
        %v590 = vld [vmem:[#allocation7 + $0x1c0] sm:$0xff]
        %v591 = vld [vmem:[#allocation7 + $0x1c8] sm:$0xff]
        %v592 = vld [vmem:[#allocation7 + $0x1d0] sm:$0xff]
        %v593 = vld [vmem:[#allocation7 + $0x1d8] sm:$0xff]
        %v594 = vld [vmem:[#allocation7 + $0x1e0] sm:$0xff]
        %v595 = vld [vmem:[#allocation7 + $0x1e8] sm:$0xff]
        %v596 = vld [vmem:[#allocation7 + $0x1f0] sm:$0xff]
        %v597 = vld [vmem:[#allocation7 + $0x1f8] sm:$0xff]
        %v598 = vld [vmem:[%s3] sm:$0xf]
        %v600 = vlaneseq
        %v601 = vshrl.u32 %v600, 7
        %v602 = vsub.s32 0, %v601
        %v603 = vrot.slane %v598, %v602
        %v604 = vlaneseq
        %v605 = vshrl.u32 %v604, 7
        %v606 = vsub.s32 1, %v605
        %v607 = vrot.slane %v598, %v606
        %v608 = vlaneseq
        %v609 = vshrl.u32 %v608, 7
        %v610 = vsub.s32 2, %v609
        %v611 = vrot.slane %v598, %v610
        %v612 = vlaneseq
        %v613 = vshrl.u32 %v612, 7
        %v614 = vsub.s32 3, %v613
        %v615 = vrot.slane %v598, %v614
        %620 = vmatprep.subr.mxu0 %v535
        %621 = vmatpush1.msra.mxu0 %v534
        %622 = vmatprep.subr.mxu0 %v539
        %623 = vmatpush1.msra.mxu0 %v538
        %624 = vmatprep.subr.mxu0 %v543
        %625 = vmatpush1.msra.mxu0 %v542
        %626 = vmatprep.subr.mxu0 %v547
        %627 = vmatpush1.msra.mxu0 %v546
        %628 = vmatprep.subr.mxu0 %v551
        %629 = vmatpush1.msra.mxu0 %v550
        %630 = vmatprep.subr.mxu0 %v555
        %631 = vmatpush1.msra.mxu0 %v554
        %632 = vmatprep.subr.mxu0 %v559
        %633 = vmatpush1.msra.mxu0 %v558
        %634 = vmatprep.subr.mxu0 %v563
        %635 = vmatpush1.msra.mxu0 %v562
        %636 = vmatprep.subr.mxu0 %v567
        %637 = vmatpush1.msra.mxu0 %v566
        %638 = vmatprep.subr.mxu0 %v571
        %639 = vmatpush1.msra.mxu0 %v570
        %640 = vmatprep.subr.mxu0 %v575
        %641 = vmatpush1.msra.mxu0 %v574
        %642 = vmatprep.subr.mxu0 %v579
        %643 = vmatpush1.msra.mxu0 %v578
        %644 = vmatprep.subr.mxu0 %v583
        %645 = vmatpush1.msra.mxu0 %v582
        %646 = vmatprep.subr.mxu0 %v587
        %647 = vmatpush1.msra.mxu0 %v586
        %648 = vmatprep.subr.mxu0 %v591
        %649 = vmatpush1.msra.mxu0 %v590
        %650 = vmatprep.subr.mxu0 %v595
        %651 = vmatpush1.msra.mxu0 %v594
        %652 = vmatprep.subr.mxu0 0.0
        %653 = vmatpush1.msra.mxu0 0.0
        %654 = vmatprep.subr.mxu0 0.0
        %655 = vmatpush1.msra.mxu0 0.0
        %656 = vmatprep.subr.mxu0 0.0
        %657 = vmatpush1.msra.mxu0 0.0
        %658 = vmatprep.subr.mxu0 0.0
        %659 = vmatpush1.msra.mxu0 0.0
        %660 = vmatprep.subr.mxu0 0.0
        %661 = vmatpush1.msra.mxu0 0.0
        %662 = vmatprep.subr.mxu0 0.0
        %663 = vmatpush1.msra.mxu0 0.0
        %664 = vmatprep.subr.mxu0 0.0
        %665 = vmatpush1.msra.mxu0 0.0
        %666 = vmatprep.subr.mxu0 0.0
        %667 = vmatpush1.msra.mxu0 0.0
        %668 = vmatprep.subr.mxu0 0.0
        %669 = vmatpush1.msra.mxu0 0.0
        %670 = vmatprep.subr.mxu0 0.0
        %671 = vmatpush1.msra.mxu0 0.0
        %672 = vmatprep.subr.mxu0 0.0
        %673 = vmatpush1.msra.mxu0 0.0
        %674 = vmatprep.subr.mxu0 0.0
        %675 = vmatpush1.msra.mxu0 0.0
        %676 = vmatprep.subr.mxu0 0.0
        %677 = vmatpush1.msra.mxu0 0.0
        %678 = vmatprep.subr.mxu0 0.0
        %679 = vmatpush1.msra.mxu0 0.0
        %680 = vmatprep.subr.mxu0 0.0
        %681 = vmatpush1.msra.mxu0 0.0
        %682 = vmatprep.subr.mxu0 0.0
        %683 = vmatpush1.msra.mxu0 0.0
        %684 = vmatprep.mubr.f32.mxu0 0.0
        %685 = vmatmul.mubr.f32.gmra.mrb[0].mxu0 %v518
        %v686 = vpop.f32.mrb[0].mxu0
        %v687 = vadd.f32 %v603, %v686
        %v688 = vpop.f32.mrb[0].mxu0
        %v689 = vadd.f32 %v607, %v688
        %690 = vmatprep.mubr.f32.mxu0 0.0
        %691 = vmatmul.mubr.f32.gmra.mrb[0].mxu0 %v519
        %v692 = vpop.f32.mrb[0].mxu0
        %v693 = vadd.f32 %v603, %v692
        %v694 = vpop.f32.mrb[0].mxu0
        %v695 = vadd.f32 %v607, %v694
        %696 = vmatprep.mubr.f32.mxu0 0.0
        %697 = vmatmul.mubr.f32.gmra.mrb[0].mxu0 %v520
        %v698 = vpop.f32.mrb[0].mxu0
        %v699 = vadd.f32 %v603, %v698
        %v700 = vpop.f32.mrb[0].mxu0
        %v701 = vadd.f32 %v607, %v700
        %702 = vmatprep.mubr.f32.mxu0 0.0
        %703 = vmatmul.mubr.f32.gmra.mrb[0].mxu0 %v521
        %v704 = vpop.f32.mrb[0].mxu0
        %v705 = vadd.f32 %v603, %v704
        %v706 = vpop.f32.mrb[0].mxu0
        %v707 = vadd.f32 %v607, %v706
        %708 = vmatprep.mubr.f32.mxu0 0.0
        %709 = vmatmul.mubr.f32.gmra.mrb[0].mxu0 %v522
        %v710 = vpop.f32.mrb[0].mxu0
        %v711 = vadd.f32 %v603, %v710
        %v712 = vpop.f32.mrb[0].mxu0
        %v713 = vadd.f32 %v607, %v712
        %714 = vmatprep.mubr.f32.mxu0 0.0
        %715 = vmatmul.mubr.f32.gmra.mrb[0].mxu0 %v523
        %v716 = vpop.f32.mrb[0].mxu0
        %v717 = vadd.f32 %v603, %v716
        %v718 = vpop.f32.mrb[0].mxu0
        %v719 = vadd.f32 %v607, %v718
        %720 = vmatprep.mubr.f32.mxu0 0.0
        %721 = vmatmul.mubr.f32.gmra.mrb[0].mxu0 %v524
        %v722 = vpop.f32.mrb[0].mxu0
        %v723 = vadd.f32 %v603, %v722
        %v724 = vpop.f32.mrb[0].mxu0
        %v725 = vadd.f32 %v607, %v724
        %726 = vmatprep.mubr.f32.mxu0 0.0
        %727 = vmatmul.mubr.f32.gmra.mrb[0].mxu0 %v525
        %v728 = vpop.f32.mrb[0].mxu0
        %v729 = vadd.f32 %v603, %v728
        %v730 = vpop.f32.mrb[0].mxu0
        %v731 = vadd.f32 %v607, %v730
        %732 = vmatprep.mubr.f32.mxu0 0.0
        %733 = vmatmul.mubr.f32.gmra.mrb[0].mxu0 %v526
        %v734 = vpop.f32.mrb[0].mxu0
        %v735 = vadd.f32 %v603, %v734
        %v736 = vpop.f32.mrb[0].mxu0
        %v737 = vadd.f32 %v607, %v736
        %738 = vmatprep.mubr.f32.mxu0 0.0
        %739 = vmatmul.mubr.f32.gmra.mrb[0].mxu0 %v527
        %v740 = vpop.f32.mrb[0].mxu0
        %v741 = vadd.f32 %v603, %v740
        %v742 = vpop.f32.mrb[0].mxu0
        %v743 = vadd.f32 %v607, %v742
        %744 = vmatprep.mubr.f32.mxu0 0.0
        %745 = vmatmul.mubr.f32.gmra.mrb[0].mxu0 %v528
        %v746 = vpop.f32.mrb[0].mxu0
        %v747 = vadd.f32 %v603, %v746
        %v748 = vpop.f32.mrb[0].mxu0
        %v749 = vadd.f32 %v607, %v748
        %750 = vmatprep.mubr.f32.mxu0 0.0
        %751 = vmatmul.mubr.f32.gmra.mrb[0].mxu0 %v529
        %v752 = vpop.f32.mrb[0].mxu0
        %v753 = vadd.f32 %v603, %v752
        %v754 = vpop.f32.mrb[0].mxu0
        %v755 = vadd.f32 %v607, %v754
        %756 = vmatprep.mubr.f32.mxu0 0.0
        %757 = vmatmul.mubr.f32.gmra.mrb[0].mxu0 %v530
        %v758 = vpop.f32.mrb[0].mxu0
        %v759 = vadd.f32 %v603, %v758
        %v760 = vpop.f32.mrb[0].mxu0
        %v761 = vadd.f32 %v607, %v760
        %762 = vmatprep.mubr.f32.mxu0 0.0
        %763 = vmatmul.mubr.f32.gmra.mrb[0].mxu0 %v531
        %v764 = vpop.f32.mrb[0].mxu0
        %v765 = vadd.f32 %v603, %v764
        %v766 = vpop.f32.mrb[0].mxu0
        %v767 = vadd.f32 %v607, %v766
        %768 = vmatprep.mubr.f32.mxu0 0.0
        %769 = vmatmul.mubr.f32.gmra.mrb[0].mxu0 %v532
        %v770 = vpop.f32.mrb[0].mxu0
        %v771 = vadd.f32 %v603, %v770
        %v772 = vpop.f32.mrb[0].mxu0
        %v773 = vadd.f32 %v607, %v772
        %774 = vmatprep.mubr.f32.mxu0 0.0
        %775 = vmatmul.mubr.f32.gmra.mrb[0].mxu0 %v533
        %v776 = vpop.f32.mrb[0].mxu0
        %v777 = vadd.f32 %v603, %v776
        %v778 = vpop.f32.mrb[0].mxu0
        %v779 = vadd.f32 %v607, %v778
        %780 = vdwg.mxu0
        %781 = vmatprep.subr.mxu0 %v537
        %782 = vmatpush1.msra.mxu0 %v536
        %783 = vmatprep.subr.mxu0 %v541
        %784 = vmatpush1.msra.mxu0 %v540
        %785 = vmatprep.subr.mxu0 %v545
        %786 = vmatpush1.msra.mxu0 %v544
        %787 = vmatprep.subr.mxu0 %v549
        %788 = vmatpush1.msra.mxu0 %v548
        %789 = vmatprep.subr.mxu0 %v553
        %790 = vmatpush1.msra.mxu0 %v552
        %791 = vmatprep.subr.mxu0 %v557
        %792 = vmatpush1.msra.mxu0 %v556
        %793 = vmatprep.subr.mxu0 %v561
        %794 = vmatpush1.msra.mxu0 %v560
        %795 = vmatprep.subr.mxu0 %v565
        %796 = vmatpush1.msra.mxu0 %v564
        %797 = vmatprep.subr.mxu0 %v569
        %798 = vmatpush1.msra.mxu0 %v568
        %799 = vmatprep.subr.mxu0 %v573
        %800 = vmatpush1.msra.mxu0 %v572
        %801 = vmatprep.subr.mxu0 %v577
        %802 = vmatpush1.msra.mxu0 %v576
        %803 = vmatprep.subr.mxu0 %v581
        %804 = vmatpush1.msra.mxu0 %v580
        %805 = vmatprep.subr.mxu0 %v585
        %806 = vmatpush1.msra.mxu0 %v584
        %807 = vmatprep.subr.mxu0 %v589
        %808 = vmatpush1.msra.mxu0 %v588
        %809 = vmatprep.subr.mxu0 %v593
        %810 = vmatpush1.msra.mxu0 %v592
        %811 = vmatprep.subr.mxu0 %v597
        %812 = vmatpush1.msra.mxu0 %v596
        %813 = vmatprep.subr.mxu0 0.0
        %814 = vmatpush1.msra.mxu0 0.0
        %815 = vmatprep.subr.mxu0 0.0
        %816 = vmatpush1.msra.mxu0 0.0
        %817 = vmatprep.subr.mxu0 0.0
        %818 = vmatpush1.msra.mxu0 0.0
        %819 = vmatprep.subr.mxu0 0.0
        %820 = vmatpush1.msra.mxu0 0.0
        %821 = vmatprep.subr.mxu0 0.0
        %822 = vmatpush1.msra.mxu0 0.0
        %823 = vmatprep.subr.mxu0 0.0
        %824 = vmatpush1.msra.mxu0 0.0
        %825 = vmatprep.subr.mxu0 0.0
        %826 = vmatpush1.msra.mxu0 0.0
        %827 = vmatprep.subr.mxu0 0.0
        %828 = vmatpush1.msra.mxu0 0.0
        %829 = vmatprep.subr.mxu0 0.0
        %830 = vmatpush1.msra.mxu0 0.0
        %831 = vmatprep.subr.mxu0 0.0
        %832 = vmatpush1.msra.mxu0 0.0
        %833 = vmatprep.subr.mxu0 0.0
        %834 = vmatpush1.msra.mxu0 0.0
        %835 = vmatprep.subr.mxu0 0.0
        %836 = vmatpush1.msra.mxu0 0.0
        %837 = vmatprep.subr.mxu0 0.0
        %838 = vmatpush1.msra.mxu0 0.0
        %839 = vmatprep.subr.mxu0 0.0
        %840 = vmatpush1.msra.mxu0 0.0
        %841 = vmatprep.subr.mxu0 0.0
        %842 = vmatpush1.msra.mxu0 0.0
        %843 = vmatprep.subr.mxu0 0.0
        %844 = vmatpush1.msra.mxu0 0.0
        %845 = vmatprep.mubr.f32.mxu0 0.0
        %846 = vmatmul.mubr.f32.gmra.mrb[0].mxu0 %v518
        %v847 = vpop.f32.mrb[0].mxu0
        %v848 = vadd.f32 %v611, %v847
        %v849 = vpop.f32.mrb[0].mxu0
        %v850 = vadd.f32 %v615, %v849
        %851 = vmatprep.mubr.f32.mxu0 0.0
        %852 = vmatmul.mubr.f32.gmra.mrb[0].mxu0 %v519
        %v853 = vpop.f32.mrb[0].mxu0
        %v854 = vadd.f32 %v611, %v853
        %v855 = vpop.f32.mrb[0].mxu0
        %v856 = vadd.f32 %v615, %v855
        %857 = vmatprep.mubr.f32.mxu0 0.0
        %858 = vmatmul.mubr.f32.gmra.mrb[0].mxu0 %v520
        %v859 = vpop.f32.mrb[0].mxu0
        %v860 = vadd.f32 %v611, %v859
        %v861 = vpop.f32.mrb[0].mxu0
        %v862 = vadd.f32 %v615, %v861
        %863 = vmatprep.mubr.f32.mxu0 0.0
        %864 = vmatmul.mubr.f32.gmra.mrb[0].mxu0 %v521
        %v865 = vpop.f32.mrb[0].mxu0
        %v866 = vadd.f32 %v611, %v865
        %v867 = vpop.f32.mrb[0].mxu0
        %v868 = vadd.f32 %v615, %v867
        %869 = vmatprep.mubr.f32.mxu0 0.0
        %870 = vmatmul.mubr.f32.gmra.mrb[0].mxu0 %v522
        %v871 = vpop.f32.mrb[0].mxu0
        %v872 = vadd.f32 %v611, %v871
        %v873 = vpop.f32.mrb[0].mxu0
        %v874 = vadd.f32 %v615, %v873
        %875 = vmatprep.mubr.f32.mxu0 0.0
        %876 = vmatmul.mubr.f32.gmra.mrb[0].mxu0 %v523
        %v877 = vpop.f32.mrb[0].mxu0
        %v878 = vadd.f32 %v611, %v877
        %v879 = vpop.f32.mrb[0].mxu0
        %v880 = vadd.f32 %v615, %v879
        %881 = vmatprep.mubr.f32.mxu0 0.0
        %882 = vmatmul.mubr.f32.gmra.mrb[0].mxu0 %v524
        %v883 = vpop.f32.mrb[0].mxu0
        %v884 = vadd.f32 %v611, %v883
        %v885 = vpop.f32.mrb[0].mxu0
        %v886 = vadd.f32 %v615, %v885
        %887 = vmatprep.mubr.f32.mxu0 0.0
        %888 = vmatmul.mubr.f32.gmra.mrb[0].mxu0 %v525
        %v889 = vpop.f32.mrb[0].mxu0
        %v890 = vadd.f32 %v611, %v889
        %v891 = vpop.f32.mrb[0].mxu0
        %v892 = vadd.f32 %v615, %v891
        %893 = vmatprep.mubr.f32.mxu0 0.0
        %894 = vmatmul.mubr.f32.gmra.mrb[0].mxu0 %v526
        %v895 = vpop.f32.mrb[0].mxu0
        %v896 = vadd.f32 %v611, %v895
        %v897 = vpop.f32.mrb[0].mxu0
        %v898 = vadd.f32 %v615, %v897
        %899 = vmatprep.mubr.f32.mxu0 0.0
        %900 = vmatmul.mubr.f32.gmra.mrb[0].mxu0 %v527
        %v901 = vpop.f32.mrb[0].mxu0
        %v902 = vadd.f32 %v611, %v901
        %v903 = vpop.f32.mrb[0].mxu0
        %v904 = vadd.f32 %v615, %v903
        %905 = vmatprep.mubr.f32.mxu0 0.0
        %906 = vmatmul.mubr.f32.gmra.mrb[0].mxu0 %v528
        %v907 = vpop.f32.mrb[0].mxu0
        %v908 = vadd.f32 %v611, %v907
        %v909 = vpop.f32.mrb[0].mxu0
        %v910 = vadd.f32 %v615, %v909
        %911 = vmatprep.mubr.f32.mxu0 0.0
        %912 = vmatmul.mubr.f32.gmra.mrb[0].mxu0 %v529
        %v913 = vpop.f32.mrb[0].mxu0
        %v914 = vadd.f32 %v611, %v913
        %v915 = vpop.f32.mrb[0].mxu0
        %v916 = vadd.f32 %v615, %v915
        %917 = vmatprep.mubr.f32.mxu0 0.0
        %918 = vmatmul.mubr.f32.gmra.mrb[0].mxu0 %v530
        %v919 = vpop.f32.mrb[0].mxu0
        %v920 = vadd.f32 %v611, %v919
        %v921 = vpop.f32.mrb[0].mxu0
        %v922 = vadd.f32 %v615, %v921
        %923 = vmatprep.mubr.f32.mxu0 0.0
        %924 = vmatmul.mubr.f32.gmra.mrb[0].mxu0 %v531
        %v925 = vpop.f32.mrb[0].mxu0
        %v926 = vadd.f32 %v611, %v925
        %v927 = vpop.f32.mrb[0].mxu0
        %v928 = vadd.f32 %v615, %v927
        %929 = vmatprep.mubr.f32.mxu0 0.0
        %930 = vmatmul.mubr.f32.gmra.mrb[0].mxu0 %v532
        %v931 = vpop.f32.mrb[0].mxu0
        %v932 = vadd.f32 %v611, %v931
        %v933 = vpop.f32.mrb[0].mxu0
        %v934 = vadd.f32 %v615, %v933
        %935 = vmatprep.mubr.f32.mxu0 0.0
        %936 = vmatmul.mubr.f32.gmra.mrb[0].mxu0 %v533
        %v937 = vpop.f32.mrb[0].mxu0
        %v938 = vadd.f32 %v611, %v937
        %v939 = vpop.f32.mrb[0].mxu0
        %v940 = vadd.f32 %v615, %v939
        %941 = vdwg.mxu0
        %v942 = vtanh.pop %v687
        %v943 = vtanh.pop %v689
        %v944 = vtanh.pop %v848
        %v945 = vtanh.pop %v850
        %v946 = vtanh.pop %v693
        %v947 = vtanh.pop %v695
        %v948 = vtanh.pop %v854
        %v949 = vtanh.pop %v856
        %v950 = vtanh.pop %v699
        %v951 = vtanh.pop %v701
        %v952 = vtanh.pop %v860
        %v953 = vtanh.pop %v862
        %v954 = vtanh.pop %v705
        %v955 = vtanh.pop %v707
        %v956 = vtanh.pop %v866
        %v957 = vtanh.pop %v868
        %v958 = vtanh.pop %v711
        %v959 = vtanh.pop %v713
        %v960 = vtanh.pop %v872
        %v961 = vtanh.pop %v874
        %v962 = vtanh.pop %v717
        %v963 = vtanh.pop %v719
        %v964 = vtanh.pop %v878
        %v965 = vtanh.pop %v880
        %v966 = vtanh.pop %v723
        %v967 = vtanh.pop %v725
        %v968 = vtanh.pop %v884
        %v969 = vtanh.pop %v886
        %v970 = vtanh.pop %v729
        %v971 = vtanh.pop %v731
        %v972 = vtanh.pop %v890
        %v973 = vtanh.pop %v892
        %v974 = vtanh.pop %v735
        %v975 = vtanh.pop %v737
        %v976 = vtanh.pop %v896
        %v977 = vtanh.pop %v898
        %v978 = vtanh.pop %v741
        %v979 = vtanh.pop %v743
        %v980 = vtanh.pop %v902
        %v981 = vtanh.pop %v904
        %v982 = vtanh.pop %v747
        %v983 = vtanh.pop %v749
        %v984 = vtanh.pop %v908
        %v985 = vtanh.pop %v910
        %v986 = vtanh.pop %v753
        %v987 = vtanh.pop %v755
        %v988 = vtanh.pop %v914
        %v989 = vtanh.pop %v916
        %v990 = vtanh.pop %v759
        %v991 = vtanh.pop %v761
        %v992 = vtanh.pop %v920
        %v993 = vtanh.pop %v922
        %v994 = vtanh.pop %v765
        %v995 = vtanh.pop %v767
        %v996 = vtanh.pop %v926
        %v997 = vtanh.pop %v928
        %v998 = vtanh.pop %v771
        %v999 = vtanh.pop %v773
        %v1000 = vtanh.pop %v932
        %v1001 = vtanh.pop %v934
        %v1002 = vtanh.pop %v777
        %v1003 = vtanh.pop %v779
        %v1004 = vtanh.pop %v938
        %v1005 = vtanh.pop %v940
        %v1006 = vld [vmem:[#allocation8] sm:$0xff]
        %v1007 = vld [vmem:[#allocation8 + $0x8] sm:$0xff]
        %v1008 = vld [vmem:[#allocation8 + $0x10] sm:$0xff]
        %v1009 = vld [vmem:[#allocation8 + $0x18] sm:$0xff]
        %v1010 = vld [vmem:[#allocation8 + $0x20] sm:$0xff]
        %v1011 = vld [vmem:[#allocation8 + $0x28] sm:$0xff]
        %v1012 = vld [vmem:[#allocation8 + $0x30] sm:$0xff]
        %v1013 = vld [vmem:[#allocation8 + $0x38] sm:$0xff]
        %v1014 = vld [vmem:[#allocation8 + $0x40] sm:$0xff]
        %v1015 = vld [vmem:[#allocation8 + $0x48] sm:$0xff]
        %v1016 = vld [vmem:[#allocation8 + $0x50] sm:$0xff]
        %v1017 = vld [vmem:[#allocation8 + $0x58] sm:$0xff]
        %v1018 = vld [vmem:[#allocation8 + $0x60] sm:$0xff]
        %v1019 = vld [vmem:[#allocation8 + $0x68] sm:$0xff]
        %v1020 = vld [vmem:[#allocation8 + $0x70] sm:$0xff]
        %v1021 = vld [vmem:[#allocation8 + $0x78] sm:$0xff]
        %v1022 = vld [vmem:[#allocation8 + $0x80] sm:$0xff]
        %v1023 = vld [vmem:[#allocation8 + $0x88] sm:$0xff]
        %v1024 = vld [vmem:[#allocation8 + $0x90] sm:$0xff]
        %v1025 = vld [vmem:[#allocation8 + $0x98] sm:$0xff]
        %v1026 = vld [vmem:[#allocation8 + $0xa0] sm:$0xff]
        %v1027 = vld [vmem:[#allocation8 + $0xa8] sm:$0xff]
        %v1028 = vld [vmem:[#allocation8 + $0xb0] sm:$0xff]
        %v1029 = vld [vmem:[#allocation8 + $0xb8] sm:$0xff]
        %v1030 = vld [vmem:[#allocation8 + $0xc0] sm:$0xff]
        %v1031 = vld [vmem:[#allocation8 + $0xc8] sm:$0xff]
        %v1032 = vld [vmem:[#allocation8 + $0xd0] sm:$0xff]
        %v1033 = vld [vmem:[#allocation8 + $0xd8] sm:$0xff]
        %v1034 = vld [vmem:[#allocation8 + $0xe0] sm:$0xff]
        %v1035 = vld [vmem:[#allocation8 + $0xe8] sm:$0xff]
        %v1036 = vld [vmem:[#allocation8 + $0xf0] sm:$0xff]
        %v1037 = vld [vmem:[#allocation8 + $0xf8] sm:$0xff]
        %v1038 = vld [vmem:[#allocation8 + $0x100] sm:$0xff]
        %v1039 = vld [vmem:[#allocation8 + $0x108] sm:$0xff]
        %v1040 = vld [vmem:[#allocation8 + $0x110] sm:$0xff]
        %v1041 = vld [vmem:[#allocation8 + $0x118] sm:$0xff]
        %v1042 = vld [vmem:[#allocation8 + $0x120] sm:$0xff]
        %v1043 = vld [vmem:[#allocation8 + $0x128] sm:$0xff]
        %v1044 = vld [vmem:[#allocation8 + $0x130] sm:$0xff]
        %v1045 = vld [vmem:[#allocation8 + $0x138] sm:$0xff]
        %v1046 = vld [vmem:[#allocation8 + $0x140] sm:$0xff]
        %v1047 = vld [vmem:[#allocation8 + $0x148] sm:$0xff]
        %v1048 = vld [vmem:[#allocation8 + $0x150] sm:$0xff]
        %v1049 = vld [vmem:[#allocation8 + $0x158] sm:$0xff]
        %v1050 = vld [vmem:[#allocation8 + $0x160] sm:$0xff]
        %v1051 = vld [vmem:[#allocation8 + $0x168] sm:$0xff]
        %v1052 = vld [vmem:[#allocation8 + $0x170] sm:$0xff]
        %v1053 = vld [vmem:[#allocation8 + $0x178] sm:$0xff]
        %v1054 = vld [vmem:[#allocation8 + $0x180] sm:$0xff]
        %v1055 = vld [vmem:[#allocation8 + $0x188] sm:$0xff]
        %v1056 = vld [vmem:[#allocation8 + $0x190] sm:$0xff]
        %v1057 = vld [vmem:[#allocation8 + $0x198] sm:$0xff]
        %v1058 = vld [vmem:[#allocation8 + $0x1a0] sm:$0xff]
        %v1059 = vld [vmem:[#allocation8 + $0x1a8] sm:$0xff]
        %v1060 = vld [vmem:[#allocation8 + $0x1b0] sm:$0xff]
        %v1061 = vld [vmem:[#allocation8 + $0x1b8] sm:$0xff]
        %v1062 = vld [vmem:[#allocation8 + $0x1c0] sm:$0xff]
        %v1063 = vld [vmem:[#allocation8 + $0x1c8] sm:$0xff]
        %v1064 = vld [vmem:[#allocation8 + $0x1d0] sm:$0xff]
        %v1065 = vld [vmem:[#allocation8 + $0x1d8] sm:$0xff]
        %v1066 = vld [vmem:[#allocation8 + $0x1e0] sm:$0xff]
        %v1067 = vld [vmem:[#allocation8 + $0x1e8] sm:$0xff]
        %v1068 = vld [vmem:[#allocation8 + $0x1f0] sm:$0xff]
        %v1069 = vld [vmem:[#allocation8 + $0x1f8] sm:$0xff]
        %v1070 = vld [vmem:[#allocation8 + $0x200] sm:$0xff]
        %v1071 = vld [vmem:[#allocation8 + $0x208] sm:$0xff]
        %v1072 = vld [vmem:[#allocation8 + $0x210] sm:$0xff]
        %v1073 = vld [vmem:[#allocation8 + $0x218] sm:$0xff]
        %v1074 = vld [vmem:[#allocation8 + $0x220] sm:$0xff]
        %v1075 = vld [vmem:[#allocation8 + $0x228] sm:$0xff]
        %v1076 = vld [vmem:[#allocation8 + $0x230] sm:$0xff]
        %v1077 = vld [vmem:[#allocation8 + $0x238] sm:$0xff]
        %v1078 = vld [vmem:[#allocation8 + $0x240] sm:$0xff]
        %v1079 = vld [vmem:[#allocation8 + $0x248] sm:$0xff]
        %v1080 = vld [vmem:[#allocation8 + $0x250] sm:$0xff]
        %v1081 = vld [vmem:[#allocation8 + $0x258] sm:$0xff]
        %v1082 = vld [vmem:[#allocation8 + $0x260] sm:$0xff]
        %v1083 = vld [vmem:[#allocation8 + $0x268] sm:$0xff]
        %v1084 = vld [vmem:[#allocation8 + $0x270] sm:$0xff]
        %v1085 = vld [vmem:[#allocation8 + $0x278] sm:$0xff]
        %v1086 = vld [vmem:[#allocation8 + $0x280] sm:$0xff]
        %v1087 = vld [vmem:[#allocation8 + $0x288] sm:$0xff]
        %v1088 = vld [vmem:[#allocation8 + $0x290] sm:$0xff]
        %v1089 = vld [vmem:[#allocation8 + $0x298] sm:$0xff]
        %v1090 = vld [vmem:[#allocation8 + $0x2a0] sm:$0xff]
        %v1091 = vld [vmem:[#allocation8 + $0x2a8] sm:$0xff]
        %v1092 = vld [vmem:[#allocation8 + $0x2b0] sm:$0xff]
        %v1093 = vld [vmem:[#allocation8 + $0x2b8] sm:$0xff]
        %v1094 = vld [vmem:[#allocation8 + $0x2c0] sm:$0xff]
        %v1095 = vld [vmem:[#allocation8 + $0x2c8] sm:$0xff]
        %v1096 = vld [vmem:[#allocation8 + $0x2d0] sm:$0xff]
        %v1097 = vld [vmem:[#allocation8 + $0x2d8] sm:$0xff]
        %v1098 = vld [vmem:[#allocation8 + $0x2e0] sm:$0xff]
        %v1099 = vld [vmem:[#allocation8 + $0x2e8] sm:$0xff]
        %v1100 = vld [vmem:[#allocation8 + $0x2f0] sm:$0xff]
        %v1101 = vld [vmem:[#allocation8 + $0x2f8] sm:$0xff]
        %v1102 = vld [vmem:[#allocation8 + $0x300] sm:$0xff]
        %v1103 = vld [vmem:[#allocation8 + $0x308] sm:$0xff]
        %v1104 = vld [vmem:[#allocation8 + $0x310] sm:$0xff]
        %v1105 = vld [vmem:[#allocation8 + $0x318] sm:$0xff]
        %v1106 = vld [vmem:[#allocation8 + $0x320] sm:$0xff]
        %v1107 = vld [vmem:[#allocation8 + $0x328] sm:$0xff]
        %v1108 = vld [vmem:[#allocation8 + $0x330] sm:$0xff]
        %v1109 = vld [vmem:[#allocation8 + $0x338] sm:$0xff]
        %v1110 = vld [vmem:[#allocation8 + $0x340] sm:$0xff]
        %v1111 = vld [vmem:[#allocation8 + $0x348] sm:$0xff]
        %v1112 = vld [vmem:[#allocation8 + $0x350] sm:$0xff]
        %v1113 = vld [vmem:[#allocation8 + $0x358] sm:$0xff]
        %v1114 = vld [vmem:[#allocation8 + $0x360] sm:$0xff]
        %v1115 = vld [vmem:[#allocation8 + $0x368] sm:$0xff]
        %v1116 = vld [vmem:[#allocation8 + $0x370] sm:$0xff]
        %v1117 = vld [vmem:[#allocation8 + $0x378] sm:$0xff]
        %v1118 = vld [vmem:[#allocation8 + $0x380] sm:$0xff]
        %v1119 = vld [vmem:[#allocation8 + $0x388] sm:$0xff]
        %v1120 = vld [vmem:[#allocation8 + $0x390] sm:$0xff]
        %v1121 = vld [vmem:[#allocation8 + $0x398] sm:$0xff]
        %v1122 = vld [vmem:[#allocation8 + $0x3a0] sm:$0xff]
        %v1123 = vld [vmem:[#allocation8 + $0x3a8] sm:$0xff]
        %v1124 = vld [vmem:[#allocation8 + $0x3b0] sm:$0xff]
        %v1125 = vld [vmem:[#allocation8 + $0x3b8] sm:$0xff]
        %v1126 = vld [vmem:[#allocation8 + $0x3c0] sm:$0xff]
        %v1127 = vld [vmem:[#allocation8 + $0x3c8] sm:$0xff]
        %v1128 = vld [vmem:[#allocation8 + $0x3d0] sm:$0xff]
        %v1129 = vld [vmem:[#allocation8 + $0x3d8] sm:$0xff]
        %v1130 = vld [vmem:[#allocation8 + $0x3e0] sm:$0xff]
        %v1131 = vld [vmem:[#allocation8 + $0x3e8] sm:$0xff]
        %v1132 = vld [vmem:[#allocation8 + $0x3f0] sm:$0xff]
        %v1133 = vld [vmem:[#allocation8 + $0x3f8] sm:$0xff]
        %v1134 = vld [vmem:[%s5] sm:$0x3]
        %v1136 = vlaneseq
        %v1137 = vshrl.u32 %v1136, 7
        %v1138 = vsub.s32 0, %v1137
        %v1139 = vrot.slane %v1134, %v1138
        %v1140 = vlaneseq
        %v1141 = vshrl.u32 %v1140, 7
        %v1142 = vsub.s32 1, %v1141
        %v1143 = vrot.slane %v1134, %v1142
        %1146 = vmatprep.subr.mxu0 %v1007
        %1147 = vmatpush1.msra.mxu0 %v1006
        %1148 = vmatprep.subr.mxu0 %v1009
        %1149 = vmatpush1.msra.mxu0 %v1008
        %1150 = vmatprep.subr.mxu0 %v1011
        %1151 = vmatpush1.msra.mxu0 %v1010
        %1152 = vmatprep.subr.mxu0 %v1013
        %1153 = vmatpush1.msra.mxu0 %v1012
        %1154 = vmatprep.subr.mxu0 %v1015
        %1155 = vmatpush1.msra.mxu0 %v1014
        %1156 = vmatprep.subr.mxu0 %v1017
        %1157 = vmatpush1.msra.mxu0 %v1016
        %1158 = vmatprep.subr.mxu0 %v1019
        %1159 = vmatpush1.msra.mxu0 %v1018
        %1160 = vmatprep.subr.mxu0 %v1021
        %1161 = vmatpush1.msra.mxu0 %v1020
        %1162 = vmatprep.subr.mxu0 %v1023
        %1163 = vmatpush1.msra.mxu0 %v1022
        %1164 = vmatprep.subr.mxu0 %v1025
        %1165 = vmatpush1.msra.mxu0 %v1024
        %1166 = vmatprep.subr.mxu0 %v1027
        %1167 = vmatpush1.msra.mxu0 %v1026
        %1168 = vmatprep.subr.mxu0 %v1029
        %1169 = vmatpush1.msra.mxu0 %v1028
        %1170 = vmatprep.subr.mxu0 %v1031
        %1171 = vmatpush1.msra.mxu0 %v1030
        %1172 = vmatprep.subr.mxu0 %v1033
        %1173 = vmatpush1.msra.mxu0 %v1032
        %1174 = vmatprep.subr.mxu0 %v1035
        %1175 = vmatpush1.msra.mxu0 %v1034
        %1176 = vmatprep.subr.mxu0 %v1037
        %1177 = vmatpush1.msra.mxu0 %v1036
        %1178 = vmatprep.subr.mxu0 %v1039
        %1179 = vmatpush1.msra.mxu0 %v1038
        %1180 = vmatprep.subr.mxu0 %v1041
        %1181 = vmatpush1.msra.mxu0 %v1040
        %1182 = vmatprep.subr.mxu0 %v1043
        %1183 = vmatpush1.msra.mxu0 %v1042
        %1184 = vmatprep.subr.mxu0 %v1045
        %1185 = vmatpush1.msra.mxu0 %v1044
        %1186 = vmatprep.subr.mxu0 %v1047
        %1187 = vmatpush1.msra.mxu0 %v1046
        %1188 = vmatprep.subr.mxu0 %v1049
        %1189 = vmatpush1.msra.mxu0 %v1048
        %1190 = vmatprep.subr.mxu0 %v1051
        %1191 = vmatpush1.msra.mxu0 %v1050
        %1192 = vmatprep.subr.mxu0 %v1053
        %1193 = vmatpush1.msra.mxu0 %v1052
        %1194 = vmatprep.subr.mxu0 %v1055
        %1195 = vmatpush1.msra.mxu0 %v1054
        %1196 = vmatprep.subr.mxu0 %v1057
        %1197 = vmatpush1.msra.mxu0 %v1056
        %1198 = vmatprep.subr.mxu0 %v1059
        %1199 = vmatpush1.msra.mxu0 %v1058
        %1200 = vmatprep.subr.mxu0 %v1061
        %1201 = vmatpush1.msra.mxu0 %v1060
        %1202 = vmatprep.subr.mxu0 %v1063
        %1203 = vmatpush1.msra.mxu0 %v1062
        %1204 = vmatprep.subr.mxu0 %v1065
        %1205 = vmatpush1.msra.mxu0 %v1064
        %1206 = vmatprep.subr.mxu0 %v1067
        %1207 = vmatpush1.msra.mxu0 %v1066
        %1208 = vmatprep.subr.mxu0 %v1069
        %1209 = vmatpush1.msra.mxu0 %v1068
        %1210 = vmatprep.mubr.f32.mxu0 %v943
        %1211 = vmatmul.mubr.f32.gmra.mrb[0].mxu0 %v942
        %v1212 = vpop.f32.mrb[0].mxu0
        %v1213 = vadd.f32 %v1139, %v1212
        %v1214 = vpop.f32.mrb[0].mxu0
        %v1215 = vadd.f32 %v1143, %v1214
        %1216 = vmatprep.mubr.f32.mxu0 %v947
        %1217 = vmatmul.mubr.f32.gmra.mrb[0].mxu0 %v946
        %v1218 = vpop.f32.mrb[0].mxu0
        %v1219 = vadd.f32 %v1139, %v1218
        %v1220 = vpop.f32.mrb[0].mxu0
        %v1221 = vadd.f32 %v1143, %v1220
        %1222 = vmatprep.mubr.f32.mxu0 %v951
        %1223 = vmatmul.mubr.f32.gmra.mrb[0].mxu0 %v950
        %v1224 = vpop.f32.mrb[0].mxu0
        %v1225 = vadd.f32 %v1139, %v1224
        %v1226 = vpop.f32.mrb[0].mxu0
        %v1227 = vadd.f32 %v1143, %v1226
        %1228 = vmatprep.mubr.f32.mxu0 %v955
        %1229 = vmatmul.mubr.f32.gmra.mrb[0].mxu0 %v954
        %v1230 = vpop.f32.mrb[0].mxu0
        %v1231 = vadd.f32 %v1139, %v1230
        %v1232 = vpop.f32.mrb[0].mxu0
        %v1233 = vadd.f32 %v1143, %v1232
        %1234 = vmatprep.mubr.f32.mxu0 %v959
        %1235 = vmatmul.mubr.f32.gmra.mrb[0].mxu0 %v958
        %v1236 = vpop.f32.mrb[0].mxu0
        %v1237 = vadd.f32 %v1139, %v1236
        %v1238 = vpop.f32.mrb[0].mxu0
        %v1239 = vadd.f32 %v1143, %v1238
        %1240 = vmatprep.mubr.f32.mxu0 %v963
        %1241 = vmatmul.mubr.f32.gmra.mrb[0].mxu0 %v962
        %v1242 = vpop.f32.mrb[0].mxu0
        %v1243 = vadd.f32 %v1139, %v1242
        %v1244 = vpop.f32.mrb[0].mxu0
        %v1245 = vadd.f32 %v1143, %v1244
        %1246 = vmatprep.mubr.f32.mxu0 %v967
        %1247 = vmatmul.mubr.f32.gmra.mrb[0].mxu0 %v966
        %v1248 = vpop.f32.mrb[0].mxu0
        %v1249 = vadd.f32 %v1139, %v1248
        %v1250 = vpop.f32.mrb[0].mxu0
        %v1251 = vadd.f32 %v1143, %v1250
        %1252 = vmatprep.mubr.f32.mxu0 %v971
        %1253 = vmatmul.mubr.f32.gmra.mrb[0].mxu0 %v970
        %v1254 = vpop.f32.mrb[0].mxu0
        %v1255 = vadd.f32 %v1139, %v1254
        %v1256 = vpop.f32.mrb[0].mxu0
        %v1257 = vadd.f32 %v1143, %v1256
        %1258 = vmatprep.mubr.f32.mxu0 %v975
        %1259 = vmatmul.mubr.f32.gmra.mrb[0].mxu0 %v974
        %v1260 = vpop.f32.mrb[0].mxu0
        %v1261 = vadd.f32 %v1139, %v1260
        %v1262 = vpop.f32.mrb[0].mxu0
        %v1263 = vadd.f32 %v1143, %v1262
        %1264 = vmatprep.mubr.f32.mxu0 %v979
        %1265 = vmatmul.mubr.f32.gmra.mrb[0].mxu0 %v978
        %v1266 = vpop.f32.mrb[0].mxu0
        %v1267 = vadd.f32 %v1139, %v1266
        %v1268 = vpop.f32.mrb[0].mxu0
        %v1269 = vadd.f32 %v1143, %v1268
        %1270 = vmatprep.mubr.f32.mxu0 %v983
        %1271 = vmatmul.mubr.f32.gmra.mrb[0].mxu0 %v982
        %v1272 = vpop.f32.mrb[0].mxu0
        %v1273 = vadd.f32 %v1139, %v1272
        %v1274 = vpop.f32.mrb[0].mxu0
        %v1275 = vadd.f32 %v1143, %v1274
        %1276 = vmatprep.mubr.f32.mxu0 %v987
        %1277 = vmatmul.mubr.f32.gmra.mrb[0].mxu0 %v986
        %v1278 = vpop.f32.mrb[0].mxu0
        %v1279 = vadd.f32 %v1139, %v1278
        %v1280 = vpop.f32.mrb[0].mxu0
        %v1281 = vadd.f32 %v1143, %v1280
        %1282 = vmatprep.mubr.f32.mxu0 %v991
        %1283 = vmatmul.mubr.f32.gmra.mrb[0].mxu0 %v990
        %v1284 = vpop.f32.mrb[0].mxu0
        %v1285 = vadd.f32 %v1139, %v1284
        %v1286 = vpop.f32.mrb[0].mxu0
        %v1287 = vadd.f32 %v1143, %v1286
        %1288 = vmatprep.mubr.f32.mxu0 %v995
        %1289 = vmatmul.mubr.f32.gmra.mrb[0].mxu0 %v994
        %v1290 = vpop.f32.mrb[0].mxu0
        %v1291 = vadd.f32 %v1139, %v1290
        %v1292 = vpop.f32.mrb[0].mxu0
        %v1293 = vadd.f32 %v1143, %v1292
        %1294 = vmatprep.mubr.f32.mxu0 %v999
        %1295 = vmatmul.mubr.f32.gmra.mrb[0].mxu0 %v998
        %v1296 = vpop.f32.mrb[0].mxu0
        %v1297 = vadd.f32 %v1139, %v1296
        %v1298 = vpop.f32.mrb[0].mxu0
        %v1299 = vadd.f32 %v1143, %v1298
        %1300 = vmatprep.mubr.f32.mxu0 %v1003
        %1301 = vmatmul.mubr.f32.gmra.mrb[0].mxu0 %v1002
        %v1302 = vpop.f32.mrb[0].mxu0
        %v1303 = vadd.f32 %v1139, %v1302
        %v1304 = vpop.f32.mrb[0].mxu0
        %v1305 = vadd.f32 %v1143, %v1304
        %1306 = vdwg.mxu0
        %1307 = vmatprep.subr.mxu0 %v1071
        %1308 = vmatpush1.msra.mxu0 %v1070
        %1309 = vmatprep.subr.mxu0 %v1073
        %1310 = vmatpush1.msra.mxu0 %v1072
        %1311 = vmatprep.subr.mxu0 %v1075
        %1312 = vmatpush1.msra.mxu0 %v1074
        %1313 = vmatprep.subr.mxu0 %v1077
        %1314 = vmatpush1.msra.mxu0 %v1076
        %1315 = vmatprep.subr.mxu0 %v1079
        %1316 = vmatpush1.msra.mxu0 %v1078
        %1317 = vmatprep.subr.mxu0 %v1081
        %1318 = vmatpush1.msra.mxu0 %v1080
        %1319 = vmatprep.subr.mxu0 %v1083
        %1320 = vmatpush1.msra.mxu0 %v1082
        %1321 = vmatprep.subr.mxu0 %v1085
        %1322 = vmatpush1.msra.mxu0 %v1084
        %1323 = vmatprep.subr.mxu0 %v1087
        %1324 = vmatpush1.msra.mxu0 %v1086
        %1325 = vmatprep.subr.mxu0 %v1089
        %1326 = vmatpush1.msra.mxu0 %v1088
        %1327 = vmatprep.subr.mxu0 %v1091
        %1328 = vmatpush1.msra.mxu0 %v1090
        %1329 = vmatprep.subr.mxu0 %v1093
        %1330 = vmatpush1.msra.mxu0 %v1092
        %1331 = vmatprep.subr.mxu0 %v1095
        %1332 = vmatpush1.msra.mxu0 %v1094
        %1333 = vmatprep.subr.mxu0 %v1097
        %1334 = vmatpush1.msra.mxu0 %v1096
        %1335 = vmatprep.subr.mxu0 %v1099
        %1336 = vmatpush1.msra.mxu0 %v1098
        %1337 = vmatprep.subr.mxu0 %v1101
        %1338 = vmatpush1.msra.mxu0 %v1100
        %1339 = vmatprep.subr.mxu0 %v1103
        %1340 = vmatpush1.msra.mxu0 %v1102
        %1341 = vmatprep.subr.mxu0 %v1105
        %1342 = vmatpush1.msra.mxu0 %v1104
        %1343 = vmatprep.subr.mxu0 %v1107
        %1344 = vmatpush1.msra.mxu0 %v1106
        %1345 = vmatprep.subr.mxu0 %v1109
        %1346 = vmatpush1.msra.mxu0 %v1108
        %1347 = vmatprep.subr.mxu0 %v1111
        %1348 = vmatpush1.msra.mxu0 %v1110
        %1349 = vmatprep.subr.mxu0 %v1113
        %1350 = vmatpush1.msra.mxu0 %v1112
        %1351 = vmatprep.subr.mxu0 %v1115
        %1352 = vmatpush1.msra.mxu0 %v1114
        %1353 = vmatprep.subr.mxu0 %v1117
        %1354 = vmatpush1.msra.mxu0 %v1116
        %1355 = vmatprep.subr.mxu0 %v1119
        %1356 = vmatpush1.msra.mxu0 %v1118
        %1357 = vmatprep.subr.mxu0 %v1121
        %1358 = vmatpush1.msra.mxu0 %v1120
        %1359 = vmatprep.subr.mxu0 %v1123
        %1360 = vmatpush1.msra.mxu0 %v1122
        %1361 = vmatprep.subr.mxu0 %v1125
        %1362 = vmatpush1.msra.mxu0 %v1124
        %1363 = vmatprep.subr.mxu0 %v1127
        %1364 = vmatpush1.msra.mxu0 %v1126
        %1365 = vmatprep.subr.mxu0 %v1129
        %1366 = vmatpush1.msra.mxu0 %v1128
        %1367 = vmatprep.subr.mxu0 %v1131
        %1368 = vmatpush1.msra.mxu0 %v1130
        %1369 = vmatprep.subr.mxu0 %v1133
        %1370 = vmatpush1.msra.mxu0 %v1132
        %1371 = vmatprep.mubr.f32.mxu0 %v945
        %1372 = vmatmul.mubr.f32.gmra.mrb[0].mxu0 %v944
        %v1373 = vpop.f32.mrb[0].mxu0
        %v1374 = vadd.f32 %v1213, %v1373
        %v1375 = vpop.f32.mrb[0].mxu0
        %v1376 = vadd.f32 %v1215, %v1375
        %1377 = vmatprep.mubr.f32.mxu0 %v949
        %1378 = vmatmul.mubr.f32.gmra.mrb[0].mxu0 %v948
        %v1379 = vpop.f32.mrb[0].mxu0
        %v1380 = vadd.f32 %v1219, %v1379
        %v1381 = vpop.f32.mrb[0].mxu0
        %v1382 = vadd.f32 %v1221, %v1381
        %1383 = vmatprep.mubr.f32.mxu0 %v953
        %1384 = vmatmul.mubr.f32.gmra.mrb[0].mxu0 %v952
        %v1385 = vpop.f32.mrb[0].mxu0
        %v1386 = vadd.f32 %v1225, %v1385
        %v1387 = vpop.f32.mrb[0].mxu0
        %v1388 = vadd.f32 %v1227, %v1387
        %1389 = vmatprep.mubr.f32.mxu0 %v957
        %1390 = vmatmul.mubr.f32.gmra.mrb[0].mxu0 %v956
        %v1391 = vpop.f32.mrb[0].mxu0
        %v1392 = vadd.f32 %v1231, %v1391
        %v1393 = vpop.f32.mrb[0].mxu0
        %v1394 = vadd.f32 %v1233, %v1393
        %1395 = vmatprep.mubr.f32.mxu0 %v961
        %1396 = vmatmul.mubr.f32.gmra.mrb[0].mxu0 %v960
        %v1397 = vpop.f32.mrb[0].mxu0
        %v1398 = vadd.f32 %v1237, %v1397
        %v1399 = vpop.f32.mrb[0].mxu0
        %v1400 = vadd.f32 %v1239, %v1399
        %1401 = vmatprep.mubr.f32.mxu0 %v965
        %1402 = vmatmul.mubr.f32.gmra.mrb[0].mxu0 %v964
        %v1403 = vpop.f32.mrb[0].mxu0
        %v1404 = vadd.f32 %v1243, %v1403
        %v1405 = vpop.f32.mrb[0].mxu0
        %v1406 = vadd.f32 %v1245, %v1405
        %1407 = vmatprep.mubr.f32.mxu0 %v969
        %1408 = vmatmul.mubr.f32.gmra.mrb[0].mxu0 %v968
        %v1409 = vpop.f32.mrb[0].mxu0
        %v1410 = vadd.f32 %v1249, %v1409
        %v1411 = vpop.f32.mrb[0].mxu0
        %v1412 = vadd.f32 %v1251, %v1411
        %1413 = vmatprep.mubr.f32.mxu0 %v973
        %1414 = vmatmul.mubr.f32.gmra.mrb[0].mxu0 %v972
        %v1415 = vpop.f32.mrb[0].mxu0
        %v1416 = vadd.f32 %v1255, %v1415
        %v1417 = vpop.f32.mrb[0].mxu0
        %v1418 = vadd.f32 %v1257, %v1417
        %1419 = vmatprep.mubr.f32.mxu0 %v977
        %1420 = vmatmul.mubr.f32.gmra.mrb[0].mxu0 %v976
        %v1421 = vpop.f32.mrb[0].mxu0
        %v1422 = vadd.f32 %v1261, %v1421
        %v1423 = vpop.f32.mrb[0].mxu0
        %v1424 = vadd.f32 %v1263, %v1423
        %1425 = vmatprep.mubr.f32.mxu0 %v981
        %1426 = vmatmul.mubr.f32.gmra.mrb[0].mxu0 %v980
        %v1427 = vpop.f32.mrb[0].mxu0
        %v1428 = vadd.f32 %v1267, %v1427
        %v1429 = vpop.f32.mrb[0].mxu0
        %v1430 = vadd.f32 %v1269, %v1429
        %1431 = vmatprep.mubr.f32.mxu0 %v985
        %1432 = vmatmul.mubr.f32.gmra.mrb[0].mxu0 %v984
        %v1433 = vpop.f32.mrb[0].mxu0
        %v1434 = vadd.f32 %v1273, %v1433
        %v1435 = vpop.f32.mrb[0].mxu0
        %v1436 = vadd.f32 %v1275, %v1435
        %1437 = vmatprep.mubr.f32.mxu0 %v989
        %1438 = vmatmul.mubr.f32.gmra.mrb[0].mxu0 %v988
        %v1439 = vpop.f32.mrb[0].mxu0
        %v1440 = vadd.f32 %v1279, %v1439
        %v1441 = vpop.f32.mrb[0].mxu0
        %v1442 = vadd.f32 %v1281, %v1441
        %1443 = vmatprep.mubr.f32.mxu0 %v993
        %1444 = vmatmul.mubr.f32.gmra.mrb[0].mxu0 %v992
        %v1445 = vpop.f32.mrb[0].mxu0
        %v1446 = vadd.f32 %v1285, %v1445
        %v1447 = vpop.f32.mrb[0].mxu0
        %v1448 = vadd.f32 %v1287, %v1447
        %1449 = vmatprep.mubr.f32.mxu0 %v997
        %1450 = vmatmul.mubr.f32.gmra.mrb[0].mxu0 %v996
        %v1451 = vpop.f32.mrb[0].mxu0
        %v1452 = vadd.f32 %v1291, %v1451
        %v1453 = vpop.f32.mrb[0].mxu0
        %v1454 = vadd.f32 %v1293, %v1453
        %1455 = vmatprep.mubr.f32.mxu0 %v1001
        %1456 = vmatmul.mubr.f32.gmra.mrb[0].mxu0 %v1000
        %v1457 = vpop.f32.mrb[0].mxu0
        %v1458 = vadd.f32 %v1297, %v1457
        %v1459 = vpop.f32.mrb[0].mxu0
        %v1460 = vadd.f32 %v1299, %v1459
        %1461 = vmatprep.mubr.f32.mxu0 %v1005
        %1462 = vmatmul.mubr.f32.gmra.mrb[0].mxu0 %v1004
        %v1463 = vpop.f32.mrb[0].mxu0
        %v1464 = vadd.f32 %v1303, %v1463
        %v1465 = vpop.f32.mrb[0].mxu0
        %v1466 = vadd.f32 %v1305, %v1465
        %1467 = vdwg.mxu0
        %vm1468 = vcmp.gt.f32.partialorder %v1374, 0.0
        %vm1469 = vcmp.gt.f32.partialorder %v1376, 0.0
        %vm1470 = vcmp.gt.f32.partialorder %v1380, 0.0
        %vm1471 = vcmp.gt.f32.partialorder %v1382, 0.0
        %vm1472 = vcmp.gt.f32.partialorder %v1386, 0.0
        %vm1473 = vcmp.gt.f32.partialorder %v1388, 0.0
        %vm1474 = vcmp.gt.f32.partialorder %v1392, 0.0
        %vm1475 = vcmp.gt.f32.partialorder %v1394, 0.0
        %vm1476 = vcmp.gt.f32.partialorder %v1398, 0.0
        %vm1477 = vcmp.gt.f32.partialorder %v1400, 0.0
        %vm1478 = vcmp.gt.f32.partialorder %v1404, 0.0
        %vm1479 = vcmp.gt.f32.partialorder %v1406, 0.0
        %vm1480 = vcmp.gt.f32.partialorder %v1410, 0.0
        %vm1481 = vcmp.gt.f32.partialorder %v1412, 0.0
        %vm1482 = vcmp.gt.f32.partialorder %v1416, 0.0
        %vm1483 = vcmp.gt.f32.partialorder %v1418, 0.0
        %vm1484 = vcmp.gt.f32.partialorder %v1422, 0.0
        %vm1485 = vcmp.gt.f32.partialorder %v1424, 0.0
        %vm1486 = vcmp.gt.f32.partialorder %v1428, 0.0
        %vm1487 = vcmp.gt.f32.partialorder %v1430, 0.0
        %vm1488 = vcmp.gt.f32.partialorder %v1434, 0.0
        %vm1489 = vcmp.gt.f32.partialorder %v1436, 0.0
        %vm1490 = vcmp.gt.f32.partialorder %v1440, 0.0
        %vm1491 = vcmp.gt.f32.partialorder %v1442, 0.0
        %vm1492 = vcmp.gt.f32.partialorder %v1446, 0.0
        %vm1493 = vcmp.gt.f32.partialorder %v1448, 0.0
        %vm1494 = vcmp.gt.f32.partialorder %v1452, 0.0
        %vm1495 = vcmp.gt.f32.partialorder %v1454, 0.0
        %vm1496 = vcmp.gt.f32.partialorder %v1458, 0.0
        %vm1497 = vcmp.gt.f32.partialorder %v1460, 0.0
        %vm1498 = vcmp.gt.f32.partialorder %v1464, 0.0
        %vm1499 = vcmp.gt.f32.partialorder %v1466, 0.0
        %v1500 = vmul.f32 %v1374, 1.442695
        %v1501 = vpow.pop %v1500
        %v1502 = vmul.f32 %v1376, 1.442695
        %v1503 = vpow.pop %v1502
        %v1504 = vmul.f32 %v1380, 1.442695
        %v1505 = vpow.pop %v1504
        %v1506 = vmul.f32 %v1382, 1.442695
        %v1507 = vpow.pop %v1506
        %v1508 = vmul.f32 %v1386, 1.442695
        %v1509 = vpow.pop %v1508
        %v1510 = vmul.f32 %v1388, 1.442695
        %v1511 = vpow.pop %v1510
        %v1512 = vmul.f32 %v1392, 1.442695
        %v1513 = vpow.pop %v1512
        %v1514 = vmul.f32 %v1394, 1.442695
        %v1515 = vpow.pop %v1514
        %v1516 = vmul.f32 %v1398, 1.442695
        %v1517 = vpow.pop %v1516
        %v1518 = vmul.f32 %v1400, 1.442695
        %v1519 = vpow.pop %v1518
        %v1520 = vmul.f32 %v1404, 1.442695
        %v1521 = vpow.pop %v1520
        %v1522 = vmul.f32 %v1406, 1.442695
        %v1523 = vpow.pop %v1522
        %v1524 = vmul.f32 %v1410, 1.442695
        %v1525 = vpow.pop %v1524
        %v1526 = vmul.f32 %v1412, 1.442695
        %v1527 = vpow.pop %v1526
        %v1528 = vmul.f32 %v1416, 1.442695
        %v1529 = vpow.pop %v1528
        %v1530 = vmul.f32 %v1418, 1.442695
        %v1531 = vpow.pop %v1530
        %v1532 = vmul.f32 %v1422, 1.442695
        %v1533 = vpow.pop %v1532
        %v1534 = vmul.f32 %v1424, 1.442695
        %v1535 = vpow.pop %v1534
        %v1536 = vmul.f32 %v1428, 1.442695
        %v1537 = vpow.pop %v1536
        %v1538 = vmul.f32 %v1430, 1.442695
        %v1539 = vpow.pop %v1538
        %v1540 = vmul.f32 %v1434, 1.442695
        %v1541 = vpow.pop %v1540
        %v1542 = vmul.f32 %v1436, 1.442695
        %v1543 = vpow.pop %v1542
        %v1544 = vmul.f32 %v1440, 1.442695
        %v1545 = vpow.pop %v1544
        %v1546 = vmul.f32 %v1442, 1.442695
        %v1547 = vpow.pop %v1546
        %v1548 = vmul.f32 %v1446, 1.442695
        %v1549 = vpow.pop %v1548
        %v1550 = vmul.f32 %v1448, 1.442695
        %v1551 = vpow.pop %v1550
        %v1552 = vmul.f32 %v1452, 1.442695
        %v1553 = vpow.pop %v1552
        %v1554 = vmul.f32 %v1454, 1.442695
        %v1555 = vpow.pop %v1554
        %v1556 = vmul.f32 %v1458, 1.442695
        %v1557 = vpow.pop %v1556
        %v1558 = vmul.f32 %v1460, 1.442695
        %v1559 = vpow.pop %v1558
        %v1560 = vmul.f32 %v1464, 1.442695
        %v1561 = vpow.pop %v1560
        %v1562 = vmul.f32 %v1466, 1.442695
        %v1563 = vpow.pop %v1562
        %v1564 = vsub.f32 %v1501, 1.0
        %v1565 = vsub.f32 %v1503, 1.0
        %v1566 = vsub.f32 %v1505, 1.0
        %v1567 = vsub.f32 %v1507, 1.0
        %v1568 = vsub.f32 %v1509, 1.0
        %v1569 = vsub.f32 %v1511, 1.0
        %v1570 = vsub.f32 %v1513, 1.0
        %v1571 = vsub.f32 %v1515, 1.0
        %v1572 = vsub.f32 %v1517, 1.0
        %v1573 = vsub.f32 %v1519, 1.0
        %v1574 = vsub.f32 %v1521, 1.0
        %v1575 = vsub.f32 %v1523, 1.0
        %v1576 = vsub.f32 %v1525, 1.0
        %v1577 = vsub.f32 %v1527, 1.0
        %v1578 = vsub.f32 %v1529, 1.0
        %v1579 = vsub.f32 %v1531, 1.0
        %v1580 = vsub.f32 %v1533, 1.0
        %v1581 = vsub.f32 %v1535, 1.0
        %v1582 = vsub.f32 %v1537, 1.0
        %v1583 = vsub.f32 %v1539, 1.0
        %v1584 = vsub.f32 %v1541, 1.0
        %v1585 = vsub.f32 %v1543, 1.0
        %v1586 = vsub.f32 %v1545, 1.0
        %v1587 = vsub.f32 %v1547, 1.0
        %v1588 = vsub.f32 %v1549, 1.0
        %v1589 = vsub.f32 %v1551, 1.0
        %v1590 = vsub.f32 %v1553, 1.0
        %v1591 = vsub.f32 %v1555, 1.0
        %v1592 = vsub.f32 %v1557, 1.0
        %v1593 = vsub.f32 %v1559, 1.0
        %v1594 = vsub.f32 %v1561, 1.0
        %v1595 = vsub.f32 %v1563, 1.0
        %v1596 = vmul.f32 %v1564, 1.6732632
        %v1597 = vmul.f32 %v1565, 1.6732632
        %v1598 = vmul.f32 %v1566, 1.6732632
        %v1599 = vmul.f32 %v1567, 1.6732632
        %v1600 = vmul.f32 %v1568, 1.6732632
        %v1601 = vmul.f32 %v1569, 1.6732632
        %v1602 = vmul.f32 %v1570, 1.6732632
        %v1603 = vmul.f32 %v1571, 1.6732632
        %v1604 = vmul.f32 %v1572, 1.6732632
        %v1605 = vmul.f32 %v1573, 1.6732632
        %v1606 = vmul.f32 %v1574, 1.6732632
        %v1607 = vmul.f32 %v1575, 1.6732632
        %v1608 = vmul.f32 %v1576, 1.6732632
        %v1609 = vmul.f32 %v1577, 1.6732632
        %v1610 = vmul.f32 %v1578, 1.6732632
        %v1611 = vmul.f32 %v1579, 1.6732632
        %v1612 = vmul.f32 %v1580, 1.6732632
        %v1613 = vmul.f32 %v1581, 1.6732632
        %v1614 = vmul.f32 %v1582, 1.6732632
        %v1615 = vmul.f32 %v1583, 1.6732632
        %v1616 = vmul.f32 %v1584, 1.6732632
        %v1617 = vmul.f32 %v1585, 1.6732632
        %v1618 = vmul.f32 %v1586, 1.6732632
        %v1619 = vmul.f32 %v1587, 1.6732632
        %v1620 = vmul.f32 %v1588, 1.6732632
        %v1621 = vmul.f32 %v1589, 1.6732632
        %v1622 = vmul.f32 %v1590, 1.6732632
        %v1623 = vmul.f32 %v1591, 1.6732632
        %v1624 = vmul.f32 %v1592, 1.6732632
        %v1625 = vmul.f32 %v1593, 1.6732632
        %v1626 = vmul.f32 %v1594, 1.6732632
        %v1627 = vmul.f32 %v1595, 1.6732632
        %v1628 = vsel %vm1468, %v1374, %v1596
        %v1629 = vsel %vm1469, %v1376, %v1597
        %v1630 = vsel %vm1470, %v1380, %v1598
        %v1631 = vsel %vm1471, %v1382, %v1599
        %v1632 = vsel %vm1472, %v1386, %v1600
        %v1633 = vsel %vm1473, %v1388, %v1601
        %v1634 = vsel %vm1474, %v1392, %v1602
        %v1635 = vsel %vm1475, %v1394, %v1603
        %v1636 = vsel %vm1476, %v1398, %v1604
        %v1637 = vsel %vm1477, %v1400, %v1605
        %v1638 = vsel %vm1478, %v1404, %v1606
        %v1639 = vsel %vm1479, %v1406, %v1607
        %v1640 = vsel %vm1480, %v1410, %v1608
        %v1641 = vsel %vm1481, %v1412, %v1609
        %v1642 = vsel %vm1482, %v1416, %v1610
        %v1643 = vsel %vm1483, %v1418, %v1611
        %v1644 = vsel %vm1484, %v1422, %v1612
        %v1645 = vsel %vm1485, %v1424, %v1613
        %v1646 = vsel %vm1486, %v1428, %v1614
        %v1647 = vsel %vm1487, %v1430, %v1615
        %v1648 = vsel %vm1488, %v1434, %v1616
        %v1649 = vsel %vm1489, %v1436, %v1617
        %v1650 = vsel %vm1490, %v1440, %v1618
        %v1651 = vsel %vm1491, %v1442, %v1619
        %v1652 = vsel %vm1492, %v1446, %v1620
        %v1653 = vsel %vm1493, %v1448, %v1621
        %v1654 = vsel %vm1494, %v1452, %v1622
        %v1655 = vsel %vm1495, %v1454, %v1623
        %v1656 = vsel %vm1496, %v1458, %v1624
        %v1657 = vsel %vm1497, %v1460, %v1625
        %v1658 = vsel %vm1498, %v1464, %v1626
        %v1659 = vsel %vm1499, %v1466, %v1627
        %v1660 = vmul.f32 %v1628, 1.050701
        %v1661 = vmul.f32 %v1629, 1.050701
        %v1662 = vmul.f32 %v1630, 1.050701
        %v1663 = vmul.f32 %v1631, 1.050701
        %v1664 = vmul.f32 %v1632, 1.050701
        %v1665 = vmul.f32 %v1633, 1.050701
        %v1666 = vmul.f32 %v1634, 1.050701
        %v1667 = vmul.f32 %v1635, 1.050701
        %v1668 = vmul.f32 %v1636, 1.050701
        %v1669 = vmul.f32 %v1637, 1.050701
        %v1670 = vmul.f32 %v1638, 1.050701
        %v1671 = vmul.f32 %v1639, 1.050701
        %v1672 = vmul.f32 %v1640, 1.050701
        %v1673 = vmul.f32 %v1641, 1.050701
        %v1674 = vmul.f32 %v1642, 1.050701
        %v1675 = vmul.f32 %v1643, 1.050701
        %v1676 = vmul.f32 %v1644, 1.050701
        %v1677 = vmul.f32 %v1645, 1.050701
        %v1678 = vmul.f32 %v1646, 1.050701
        %v1679 = vmul.f32 %v1647, 1.050701
        %v1680 = vmul.f32 %v1648, 1.050701
        %v1681 = vmul.f32 %v1649, 1.050701
        %v1682 = vmul.f32 %v1650, 1.050701
        %v1683 = vmul.f32 %v1651, 1.050701
        %v1684 = vmul.f32 %v1652, 1.050701
        %v1685 = vmul.f32 %v1653, 1.050701
        %v1686 = vmul.f32 %v1654, 1.050701
        %v1687 = vmul.f32 %v1655, 1.050701
        %v1688 = vmul.f32 %v1656, 1.050701
        %v1689 = vmul.f32 %v1657, 1.050701
        %v1690 = vmul.f32 %v1658, 1.050701
        %v1691 = vmul.f32 %v1659, 1.050701
        %v1692 = vld [vmem:[%s449] sm:$0xff]
        %v1693 = vld [vmem:[%s449 + $0x8] sm:$0xff]
        %v1694 = vld [vmem:[%s449 + $0x10] sm:$0xff]
        %v1695 = vld [vmem:[%s449 + $0x18] sm:$0xff]
        %v1696 = vld [vmem:[%s449 + $0x20] sm:$0xff]
        %v1697 = vld [vmem:[%s449 + $0x28] sm:$0xff]
        %v1698 = vld [vmem:[%s449 + $0x30] sm:$0xff]
        %v1699 = vld [vmem:[%s449 + $0x38] sm:$0xff]
        %v1700 = vld [vmem:[%s449 + $0x40] sm:$0xff]
        %v1701 = vld [vmem:[%s449 + $0x48] sm:$0xff]
        %v1702 = vld [vmem:[%s449 + $0x50] sm:$0xff]
        %v1703 = vld [vmem:[%s449 + $0x58] sm:$0xff]
        %v1704 = vld [vmem:[%s449 + $0x60] sm:$0xff]
        %v1705 = vld [vmem:[%s449 + $0x68] sm:$0xff]
        %v1706 = vld [vmem:[%s449 + $0x70] sm:$0xff]
        %v1707 = vld [vmem:[%s449 + $0x78] sm:$0xff]
        %v1708 = vmul.f32 %v1661, 0.5
        %v1709 = vmul.f32 %v1663, 0.5
        %v1710 = vmul.f32 %v1665, 0.5
        %v1711 = vmul.f32 %v1667, 0.5
        %v1712 = vmul.f32 %v1669, 0.5
        %v1713 = vmul.f32 %v1671, 0.5
        %v1714 = vmul.f32 %v1673, 0.5
        %v1715 = vmul.f32 %v1675, 0.5
        %v1716 = vmul.f32 %v1677, 0.5
        %v1717 = vmul.f32 %v1679, 0.5
        %v1718 = vmul.f32 %v1681, 0.5
        %v1719 = vmul.f32 %v1683, 0.5
        %v1720 = vmul.f32 %v1685, 0.5
        %v1721 = vmul.f32 %v1687, 0.5
        %v1722 = vmul.f32 %v1689, 0.5
        %v1723 = vmul.f32 %v1691, 0.5
        %v1724 = vmul.f32 %v1708, 1.442695
        %v1725 = vpow.pop %v1724
        %v1726 = vmul.f32 %v1709, 1.442695
        %v1727 = vpow.pop %v1726
        %v1728 = vmul.f32 %v1710, 1.442695
        %v1729 = vpow.pop %v1728
        %v1730 = vmul.f32 %v1711, 1.442695
        %v1731 = vpow.pop %v1730
        %v1732 = vmul.f32 %v1712, 1.442695
        %v1733 = vpow.pop %v1732
        %v1734 = vmul.f32 %v1713, 1.442695
        %v1735 = vpow.pop %v1734
        %v1736 = vmul.f32 %v1714, 1.442695
        %v1737 = vpow.pop %v1736
        %v1738 = vmul.f32 %v1715, 1.442695
        %v1739 = vpow.pop %v1738
        %v1740 = vmul.f32 %v1716, 1.442695
        %v1741 = vpow.pop %v1740
        %v1742 = vmul.f32 %v1717, 1.442695
        %v1743 = vpow.pop %v1742
        %v1744 = vmul.f32 %v1718, 1.442695
        %v1745 = vpow.pop %v1744
        %v1746 = vmul.f32 %v1719, 1.442695
        %v1747 = vpow.pop %v1746
        %v1748 = vmul.f32 %v1720, 1.442695
        %v1749 = vpow.pop %v1748
        %v1750 = vmul.f32 %v1721, 1.442695
        %v1751 = vpow.pop %v1750
        %v1752 = vmul.f32 %v1722, 1.442695
        %v1753 = vpow.pop %v1752
        %v1754 = vmul.f32 %v1723, 1.442695
        %v1755 = vpow.pop %v1754
        %v1756 = vmul.f32 %v1692, %v1725
        %v1757 = vmul.f32 %v1693, %v1727
        %v1758 = vmul.f32 %v1694, %v1729
        %v1759 = vmul.f32 %v1695, %v1731
        %v1760 = vmul.f32 %v1696, %v1733
        %v1761 = vmul.f32 %v1697, %v1735
        %v1762 = vmul.f32 %v1698, %v1737
        %v1763 = vmul.f32 %v1699, %v1739
        %v1764 = vmul.f32 %v1700, %v1741
        %v1765 = vmul.f32 %v1701, %v1743
        %v1766 = vmul.f32 %v1702, %v1745
        %v1767 = vmul.f32 %v1703, %v1747
        %v1768 = vmul.f32 %v1704, %v1749
        %v1769 = vmul.f32 %v1705, %v1751
        %v1770 = vmul.f32 %v1706, %v1753
        %v1771 = vmul.f32 %v1707, %v1755
        %v1772 = vadd.f32 %v1756, %v1660
        %v1773 = vadd.f32 %v1757, %v1662
        %v1774 = vadd.f32 %v1758, %v1664
        %v1775 = vadd.f32 %v1759, %v1666
        %v1776 = vadd.f32 %v1760, %v1668
        %v1777 = vadd.f32 %v1761, %v1670
        %v1778 = vadd.f32 %v1762, %v1672
        %v1779 = vadd.f32 %v1763, %v1674
        %v1780 = vadd.f32 %v1764, %v1676
        %v1781 = vadd.f32 %v1765, %v1678
        %v1782 = vadd.f32 %v1766, %v1680
        %v1783 = vadd.f32 %v1767, %v1682
        %v1784 = vadd.f32 %v1768, %v1684
        %v1785 = vadd.f32 %v1769, %v1686
        %v1786 = vadd.f32 %v1770, %v1688
        %v1787 = vadd.f32 %v1771, %v1690
        %v1788 = vld [vmem:[#allocation10] sm:$0xff]
        %v1789 = vld [vmem:[#allocation10 + $0x8] sm:$0xff]
        %v1790 = vld [vmem:[#allocation10 + $0x10] sm:$0xff]
        %v1791 = vld [vmem:[#allocation10 + $0x18] sm:$0xff]
        %v1792 = vld [vmem:[#allocation10 + $0x20] sm:$0xff]
        %v1793 = vld [vmem:[#allocation10 + $0x28] sm:$0xff]
        %v1794 = vld [vmem:[#allocation10 + $0x30] sm:$0xff]
        %v1795 = vld [vmem:[#allocation10 + $0x38] sm:$0xff]
        %v1796 = vld [vmem:[#allocation10 + $0x40] sm:$0xff]
        %v1797 = vld [vmem:[#allocation10 + $0x48] sm:$0xff]
        %v1798 = vld [vmem:[#allocation10 + $0x50] sm:$0xff]
        %v1799 = vld [vmem:[#allocation10 + $0x58] sm:$0xff]
        %v1800 = vld [vmem:[#allocation10 + $0x60] sm:$0xff]
        %v1801 = vld [vmem:[#allocation10 + $0x68] sm:$0xff]
        %v1802 = vld [vmem:[#allocation10 + $0x70] sm:$0xff]
        %v1803 = vld [vmem:[#allocation10 + $0x78] sm:$0xff]
        %v1804 = vld [vmem:[#allocation10 + $0x80] sm:$0xff]
        %v1805 = vld [vmem:[#allocation10 + $0x88] sm:$0xff]
        %v1806 = vld [vmem:[#allocation10 + $0x90] sm:$0xff]
        %v1807 = vld [vmem:[#allocation10 + $0x98] sm:$0xff]
        %v1808 = vld [vmem:[#allocation10 + $0xa0] sm:$0xff]
        %v1809 = vld [vmem:[#allocation10 + $0xa8] sm:$0xff]
        %v1810 = vld [vmem:[#allocation10 + $0xb0] sm:$0xff]
        %v1811 = vld [vmem:[#allocation10 + $0xb8] sm:$0xff]
        %v1812 = vld [vmem:[#allocation10 + $0xc0] sm:$0xff]
        %v1813 = vld [vmem:[#allocation10 + $0xc8] sm:$0xff]
        %v1814 = vld [vmem:[#allocation10 + $0xd0] sm:$0xff]
        %v1815 = vld [vmem:[#allocation10 + $0xd8] sm:$0xff]
        %v1816 = vld [vmem:[#allocation10 + $0xe0] sm:$0xff]
        %v1817 = vld [vmem:[#allocation10 + $0xe8] sm:$0xff]
        %v1818 = vld [vmem:[#allocation10 + $0xf0] sm:$0xff]
        %v1819 = vld [vmem:[#allocation10 + $0xf8] sm:$0xff]
        %v1820 = vld [vmem:[#allocation10 + $0x100] sm:$0xff]
        %v1821 = vld [vmem:[#allocation10 + $0x108] sm:$0xff]
        %v1822 = vld [vmem:[#allocation10 + $0x110] sm:$0xff]
        %v1823 = vld [vmem:[#allocation10 + $0x118] sm:$0xff]
        %v1824 = vld [vmem:[#allocation10 + $0x120] sm:$0xff]
        %v1825 = vld [vmem:[#allocation10 + $0x128] sm:$0xff]
        %v1826 = vld [vmem:[#allocation10 + $0x130] sm:$0xff]
        %v1827 = vld [vmem:[#allocation10 + $0x138] sm:$0xff]
        %v1828 = vld [vmem:[#allocation10 + $0x140] sm:$0xff]
        %v1829 = vld [vmem:[#allocation10 + $0x148] sm:$0xff]
        %v1830 = vld [vmem:[#allocation10 + $0x150] sm:$0xff]
        %v1831 = vld [vmem:[#allocation10 + $0x158] sm:$0xff]
        %v1832 = vld [vmem:[#allocation10 + $0x160] sm:$0xff]
        %v1833 = vld [vmem:[#allocation10 + $0x168] sm:$0xff]
        %v1834 = vld [vmem:[#allocation10 + $0x170] sm:$0xff]
        %v1835 = vld [vmem:[#allocation10 + $0x178] sm:$0xff]
        %v1836 = vld [vmem:[#allocation10 + $0x180] sm:$0xff]
        %v1837 = vld [vmem:[#allocation10 + $0x188] sm:$0xff]
        %v1838 = vld [vmem:[#allocation10 + $0x190] sm:$0xff]
        %v1839 = vld [vmem:[#allocation10 + $0x198] sm:$0xff]
        %v1840 = vld [vmem:[#allocation10 + $0x1a0] sm:$0xff]
        %v1841 = vld [vmem:[#allocation10 + $0x1a8] sm:$0xff]
        %v1842 = vld [vmem:[#allocation10 + $0x1b0] sm:$0xff]
        %v1843 = vld [vmem:[#allocation10 + $0x1b8] sm:$0xff]
        %v1844 = vld [vmem:[#allocation10 + $0x1c0] sm:$0xff]
        %v1845 = vld [vmem:[#allocation10 + $0x1c8] sm:$0xff]
        %v1846 = vld [vmem:[#allocation10 + $0x1d0] sm:$0xff]
        %v1847 = vld [vmem:[#allocation10 + $0x1d8] sm:$0xff]
        %v1848 = vld [vmem:[#allocation10 + $0x1e0] sm:$0xff]
        %v1849 = vld [vmem:[#allocation10 + $0x1e8] sm:$0xff]
        %v1850 = vld [vmem:[#allocation10 + $0x1f0] sm:$0xff]
        %v1851 = vld [vmem:[#allocation10 + $0x1f8] sm:$0xff]
        %v1852 = vld [vmem:[%s7] sm:$0xf]
        %v1854 = vlaneseq
        %v1855 = vshrl.u32 %v1854, 7
        %v1856 = vsub.s32 0, %v1855
        %v1857 = vrot.slane %v1852, %v1856
        %v1858 = vlaneseq
        %v1859 = vshrl.u32 %v1858, 7
        %v1860 = vsub.s32 1, %v1859
        %v1861 = vrot.slane %v1852, %v1860
        %v1862 = vlaneseq
        %v1863 = vshrl.u32 %v1862, 7
        %v1864 = vsub.s32 2, %v1863
        %v1865 = vrot.slane %v1852, %v1864
        %v1866 = vlaneseq
        %v1867 = vshrl.u32 %v1866, 7
        %v1868 = vsub.s32 3, %v1867
        %v1869 = vrot.slane %v1852, %v1868
        %1874 = vmatprep.subr.mxu0 %v1789
        %1875 = vmatpush1.msra.mxu0 %v1788
        %1876 = vmatprep.subr.mxu0 %v1793
        %1877 = vmatpush1.msra.mxu0 %v1792
        %1878 = vmatprep.subr.mxu0 %v1797
        %1879 = vmatpush1.msra.mxu0 %v1796
        %1880 = vmatprep.subr.mxu0 %v1801
        %1881 = vmatpush1.msra.mxu0 %v1800
        %1882 = vmatprep.subr.mxu0 %v1805
        %1883 = vmatpush1.msra.mxu0 %v1804
        %1884 = vmatprep.subr.mxu0 %v1809
        %1885 = vmatpush1.msra.mxu0 %v1808
        %1886 = vmatprep.subr.mxu0 %v1813
        %1887 = vmatpush1.msra.mxu0 %v1812
        %1888 = vmatprep.subr.mxu0 %v1817
        %1889 = vmatpush1.msra.mxu0 %v1816
        %1890 = vmatprep.subr.mxu0 %v1821
        %1891 = vmatpush1.msra.mxu0 %v1820
        %1892 = vmatprep.subr.mxu0 %v1825
        %1893 = vmatpush1.msra.mxu0 %v1824
        %1894 = vmatprep.subr.mxu0 %v1829
        %1895 = vmatpush1.msra.mxu0 %v1828
        %1896 = vmatprep.subr.mxu0 %v1833
        %1897 = vmatpush1.msra.mxu0 %v1832
        %1898 = vmatprep.subr.mxu0 %v1837
        %1899 = vmatpush1.msra.mxu0 %v1836
        %1900 = vmatprep.subr.mxu0 %v1841
        %1901 = vmatpush1.msra.mxu0 %v1840
        %1902 = vmatprep.subr.mxu0 %v1845
        %1903 = vmatpush1.msra.mxu0 %v1844
        %1904 = vmatprep.subr.mxu0 %v1849
        %1905 = vmatpush1.msra.mxu0 %v1848
        %1906 = vmatprep.subr.mxu0 0.0
        %1907 = vmatpush1.msra.mxu0 0.0
        %1908 = vmatprep.subr.mxu0 0.0
        %1909 = vmatpush1.msra.mxu0 0.0
        %1910 = vmatprep.subr.mxu0 0.0
        %1911 = vmatpush1.msra.mxu0 0.0
        %1912 = vmatprep.subr.mxu0 0.0
        %1913 = vmatpush1.msra.mxu0 0.0
        %1914 = vmatprep.subr.mxu0 0.0
        %1915 = vmatpush1.msra.mxu0 0.0
        %1916 = vmatprep.subr.mxu0 0.0
        %1917 = vmatpush1.msra.mxu0 0.0
        %1918 = vmatprep.subr.mxu0 0.0
        %1919 = vmatpush1.msra.mxu0 0.0
        %1920 = vmatprep.subr.mxu0 0.0
        %1921 = vmatpush1.msra.mxu0 0.0
        %1922 = vmatprep.subr.mxu0 0.0
        %1923 = vmatpush1.msra.mxu0 0.0
        %1924 = vmatprep.subr.mxu0 0.0
        %1925 = vmatpush1.msra.mxu0 0.0
        %1926 = vmatprep.subr.mxu0 0.0
        %1927 = vmatpush1.msra.mxu0 0.0
        %1928 = vmatprep.subr.mxu0 0.0
        %1929 = vmatpush1.msra.mxu0 0.0
        %1930 = vmatprep.subr.mxu0 0.0
        %1931 = vmatpush1.msra.mxu0 0.0
        %1932 = vmatprep.subr.mxu0 0.0
        %1933 = vmatpush1.msra.mxu0 0.0
        %1934 = vmatprep.subr.mxu0 0.0
        %1935 = vmatpush1.msra.mxu0 0.0
        %1936 = vmatprep.subr.mxu0 0.0
        %1937 = vmatpush1.msra.mxu0 0.0
        %1938 = vmatprep.mubr.f32.mxu0 0.0
        %1939 = vmatmul.mubr.f32.gmra.mrb[0].mxu0 %v1772
        %v1940 = vpop.f32.mrb[0].mxu0
        %v1941 = vadd.f32 %v1857, %v1940
        %v1942 = vpop.f32.mrb[0].mxu0
        %v1943 = vadd.f32 %v1861, %v1942
        %1944 = vmatprep.mubr.f32.mxu0 0.0
        %1945 = vmatmul.mubr.f32.gmra.mrb[0].mxu0 %v1773
        %v1946 = vpop.f32.mrb[0].mxu0
        %v1947 = vadd.f32 %v1857, %v1946
        %v1948 = vpop.f32.mrb[0].mxu0
        %v1949 = vadd.f32 %v1861, %v1948
        %1950 = vmatprep.mubr.f32.mxu0 0.0
        %1951 = vmatmul.mubr.f32.gmra.mrb[0].mxu0 %v1774
        %v1952 = vpop.f32.mrb[0].mxu0
        %v1953 = vadd.f32 %v1857, %v1952
        %v1954 = vpop.f32.mrb[0].mxu0
        %v1955 = vadd.f32 %v1861, %v1954
        %1956 = vmatprep.mubr.f32.mxu0 0.0
        %1957 = vmatmul.mubr.f32.gmra.mrb[0].mxu0 %v1775
        %v1958 = vpop.f32.mrb[0].mxu0
        %v1959 = vadd.f32 %v1857, %v1958
        %v1960 = vpop.f32.mrb[0].mxu0
        %v1961 = vadd.f32 %v1861, %v1960
        %1962 = vmatprep.mubr.f32.mxu0 0.0
        %1963 = vmatmul.mubr.f32.gmra.mrb[0].mxu0 %v1776
        %v1964 = vpop.f32.mrb[0].mxu0
        %v1965 = vadd.f32 %v1857, %v1964
        %v1966 = vpop.f32.mrb[0].mxu0
        %v1967 = vadd.f32 %v1861, %v1966
        %1968 = vmatprep.mubr.f32.mxu0 0.0
        %1969 = vmatmul.mubr.f32.gmra.mrb[0].mxu0 %v1777
        %v1970 = vpop.f32.mrb[0].mxu0
        %v1971 = vadd.f32 %v1857, %v1970
        %v1972 = vpop.f32.mrb[0].mxu0
        %v1973 = vadd.f32 %v1861, %v1972
        %1974 = vmatprep.mubr.f32.mxu0 0.0
        %1975 = vmatmul.mubr.f32.gmra.mrb[0].mxu0 %v1778
        %v1976 = vpop.f32.mrb[0].mxu0
        %v1977 = vadd.f32 %v1857, %v1976
        %v1978 = vpop.f32.mrb[0].mxu0
        %v1979 = vadd.f32 %v1861, %v1978
        %1980 = vmatprep.mubr.f32.mxu0 0.0
        %1981 = vmatmul.mubr.f32.gmra.mrb[0].mxu0 %v1779
        %v1982 = vpop.f32.mrb[0].mxu0
        %v1983 = vadd.f32 %v1857, %v1982
        %v1984 = vpop.f32.mrb[0].mxu0
        %v1985 = vadd.f32 %v1861, %v1984
        %1986 = vmatprep.mubr.f32.mxu0 0.0
        %1987 = vmatmul.mubr.f32.gmra.mrb[0].mxu0 %v1780
        %v1988 = vpop.f32.mrb[0].mxu0
        %v1989 = vadd.f32 %v1857, %v1988
        %v1990 = vpop.f32.mrb[0].mxu0
        %v1991 = vadd.f32 %v1861, %v1990
        %1992 = vmatprep.mubr.f32.mxu0 0.0
        %1993 = vmatmul.mubr.f32.gmra.mrb[0].mxu0 %v1781
        %v1994 = vpop.f32.mrb[0].mxu0
        %v1995 = vadd.f32 %v1857, %v1994
        %v1996 = vpop.f32.mrb[0].mxu0
        %v1997 = vadd.f32 %v1861, %v1996
        %1998 = vmatprep.mubr.f32.mxu0 0.0
        %1999 = vmatmul.mubr.f32.gmra.mrb[0].mxu0 %v1782
        %v2000 = vpop.f32.mrb[0].mxu0
        %v2001 = vadd.f32 %v1857, %v2000
        %v2002 = vpop.f32.mrb[0].mxu0
        %v2003 = vadd.f32 %v1861, %v2002
        %2004 = vmatprep.mubr.f32.mxu0 0.0
        %2005 = vmatmul.mubr.f32.gmra.mrb[0].mxu0 %v1783
        %v2006 = vpop.f32.mrb[0].mxu0
        %v2007 = vadd.f32 %v1857, %v2006
        %v2008 = vpop.f32.mrb[0].mxu0
        %v2009 = vadd.f32 %v1861, %v2008
        %2010 = vmatprep.mubr.f32.mxu0 0.0
        %2011 = vmatmul.mubr.f32.gmra.mrb[0].mxu0 %v1784
        %v2012 = vpop.f32.mrb[0].mxu0
        %v2013 = vadd.f32 %v1857, %v2012
        %v2014 = vpop.f32.mrb[0].mxu0
        %v2015 = vadd.f32 %v1861, %v2014
        %2016 = vmatprep.mubr.f32.mxu0 0.0
        %2017 = vmatmul.mubr.f32.gmra.mrb[0].mxu0 %v1785
        %v2018 = vpop.f32.mrb[0].mxu0
        %v2019 = vadd.f32 %v1857, %v2018
        %v2020 = vpop.f32.mrb[0].mxu0
        %v2021 = vadd.f32 %v1861, %v2020
        %2022 = vmatprep.mubr.f32.mxu0 0.0
        %2023 = vmatmul.mubr.f32.gmra.mrb[0].mxu0 %v1786
        %v2024 = vpop.f32.mrb[0].mxu0
        %v2025 = vadd.f32 %v1857, %v2024
        %v2026 = vpop.f32.mrb[0].mxu0
        %v2027 = vadd.f32 %v1861, %v2026
        %2028 = vmatprep.mubr.f32.mxu0 0.0
        %2029 = vmatmul.mubr.f32.gmra.mrb[0].mxu0 %v1787
        %v2030 = vpop.f32.mrb[0].mxu0
        %v2031 = vadd.f32 %v1857, %v2030
        %v2032 = vpop.f32.mrb[0].mxu0
        %v2033 = vadd.f32 %v1861, %v2032
        %2034 = vdwg.mxu0
        %2035 = vmatprep.subr.mxu0 %v1791
        %2036 = vmatpush1.msra.mxu0 %v1790
        %2037 = vmatprep.subr.mxu0 %v1795
        %2038 = vmatpush1.msra.mxu0 %v1794
        %2039 = vmatprep.subr.mxu0 %v1799
        %2040 = vmatpush1.msra.mxu0 %v1798
        %2041 = vmatprep.subr.mxu0 %v1803
        %2042 = vmatpush1.msra.mxu0 %v1802
        %2043 = vmatprep.subr.mxu0 %v1807
        %2044 = vmatpush1.msra.mxu0 %v1806
        %2045 = vmatprep.subr.mxu0 %v1811
        %2046 = vmatpush1.msra.mxu0 %v1810
        %2047 = vmatprep.subr.mxu0 %v1815
        %2048 = vmatpush1.msra.mxu0 %v1814
        %2049 = vmatprep.subr.mxu0 %v1819
        %2050 = vmatpush1.msra.mxu0 %v1818
        %2051 = vmatprep.subr.mxu0 %v1823
        %2052 = vmatpush1.msra.mxu0 %v1822
        %2053 = vmatprep.subr.mxu0 %v1827
        %2054 = vmatpush1.msra.mxu0 %v1826
        %2055 = vmatprep.subr.mxu0 %v1831
        %2056 = vmatpush1.msra.mxu0 %v1830
        %2057 = vmatprep.subr.mxu0 %v1835
        %2058 = vmatpush1.msra.mxu0 %v1834
        %2059 = vmatprep.subr.mxu0 %v1839
        %2060 = vmatpush1.msra.mxu0 %v1838
        %2061 = vmatprep.subr.mxu0 %v1843
        %2062 = vmatpush1.msra.mxu0 %v1842
        %2063 = vmatprep.subr.mxu0 %v1847
        %2064 = vmatpush1.msra.mxu0 %v1846
        %2065 = vmatprep.subr.mxu0 %v1851
        %2066 = vmatpush1.msra.mxu0 %v1850
        %2067 = vmatprep.subr.mxu0 0.0
        %2068 = vmatpush1.msra.mxu0 0.0
        %2069 = vmatprep.subr.mxu0 0.0
        %2070 = vmatpush1.msra.mxu0 0.0
        %2071 = vmatprep.subr.mxu0 0.0
        %2072 = vmatpush1.msra.mxu0 0.0
        %2073 = vmatprep.subr.mxu0 0.0
        %2074 = vmatpush1.msra.mxu0 0.0
        %2075 = vmatprep.subr.mxu0 0.0
        %2076 = vmatpush1.msra.mxu0 0.0
        %2077 = vmatprep.subr.mxu0 0.0
        %2078 = vmatpush1.msra.mxu0 0.0
        %2079 = vmatprep.subr.mxu0 0.0
        %2080 = vmatpush1.msra.mxu0 0.0
        %2081 = vmatprep.subr.mxu0 0.0
        %2082 = vmatpush1.msra.mxu0 0.0
        %2083 = vmatprep.subr.mxu0 0.0
        %2084 = vmatpush1.msra.mxu0 0.0
        %2085 = vmatprep.subr.mxu0 0.0
        %2086 = vmatpush1.msra.mxu0 0.0
        %2087 = vmatprep.subr.mxu0 0.0
        %2088 = vmatpush1.msra.mxu0 0.0
        %2089 = vmatprep.subr.mxu0 0.0
        %2090 = vmatpush1.msra.mxu0 0.0
        %2091 = vmatprep.subr.mxu0 0.0
        %2092 = vmatpush1.msra.mxu0 0.0
        %2093 = vmatprep.subr.mxu0 0.0
        %2094 = vmatpush1.msra.mxu0 0.0
        %2095 = vmatprep.subr.mxu0 0.0
        %2096 = vmatpush1.msra.mxu0 0.0
        %2097 = vmatprep.subr.mxu0 0.0
        %2098 = vmatpush1.msra.mxu0 0.0
        %2099 = vmatprep.mubr.f32.mxu0 0.0
        %2100 = vmatmul.mubr.f32.gmra.mrb[0].mxu0 %v1772
        %v2101 = vpop.f32.mrb[0].mxu0
        %v2102 = vadd.f32 %v1865, %v2101
        %v2103 = vpop.f32.mrb[0].mxu0
        %v2104 = vadd.f32 %v1869, %v2103
        %2105 = vmatprep.mubr.f32.mxu0 0.0
        %2106 = vmatmul.mubr.f32.gmra.mrb[0].mxu0 %v1773
        %v2107 = vpop.f32.mrb[0].mxu0
        %v2108 = vadd.f32 %v1865, %v2107
        %v2109 = vpop.f32.mrb[0].mxu0
        %v2110 = vadd.f32 %v1869, %v2109
        %2111 = vmatprep.mubr.f32.mxu0 0.0
        %2112 = vmatmul.mubr.f32.gmra.mrb[0].mxu0 %v1774
        %v2113 = vpop.f32.mrb[0].mxu0
        %v2114 = vadd.f32 %v1865, %v2113
        %v2115 = vpop.f32.mrb[0].mxu0
        %v2116 = vadd.f32 %v1869, %v2115
        %2117 = vmatprep.mubr.f32.mxu0 0.0
        %2118 = vmatmul.mubr.f32.gmra.mrb[0].mxu0 %v1775
        %v2119 = vpop.f32.mrb[0].mxu0
        %v2120 = vadd.f32 %v1865, %v2119
        %v2121 = vpop.f32.mrb[0].mxu0
        %v2122 = vadd.f32 %v1869, %v2121
        %2123 = vmatprep.mubr.f32.mxu0 0.0
        %2124 = vmatmul.mubr.f32.gmra.mrb[0].mxu0 %v1776
        %v2125 = vpop.f32.mrb[0].mxu0
        %v2126 = vadd.f32 %v1865, %v2125
        %v2127 = vpop.f32.mrb[0].mxu0
        %v2128 = vadd.f32 %v1869, %v2127
        %2129 = vmatprep.mubr.f32.mxu0 0.0
        %2130 = vmatmul.mubr.f32.gmra.mrb[0].mxu0 %v1777
        %v2131 = vpop.f32.mrb[0].mxu0
        %v2132 = vadd.f32 %v1865, %v2131
        %v2133 = vpop.f32.mrb[0].mxu0
        %v2134 = vadd.f32 %v1869, %v2133
        %2135 = vmatprep.mubr.f32.mxu0 0.0
        %2136 = vmatmul.mubr.f32.gmra.mrb[0].mxu0 %v1778
        %v2137 = vpop.f32.mrb[0].mxu0
        %v2138 = vadd.f32 %v1865, %v2137
        %v2139 = vpop.f32.mrb[0].mxu0
        %v2140 = vadd.f32 %v1869, %v2139
        %2141 = vmatprep.mubr.f32.mxu0 0.0
        %2142 = vmatmul.mubr.f32.gmra.mrb[0].mxu0 %v1779
        %v2143 = vpop.f32.mrb[0].mxu0
        %v2144 = vadd.f32 %v1865, %v2143
        %v2145 = vpop.f32.mrb[0].mxu0
        %v2146 = vadd.f32 %v1869, %v2145
        %2147 = vmatprep.mubr.f32.mxu0 0.0
        %2148 = vmatmul.mubr.f32.gmra.mrb[0].mxu0 %v1780
        %v2149 = vpop.f32.mrb[0].mxu0
        %v2150 = vadd.f32 %v1865, %v2149
        %v2151 = vpop.f32.mrb[0].mxu0
        %v2152 = vadd.f32 %v1869, %v2151
        %2153 = vmatprep.mubr.f32.mxu0 0.0
        %2154 = vmatmul.mubr.f32.gmra.mrb[0].mxu0 %v1781
        %v2155 = vpop.f32.mrb[0].mxu0
        %v2156 = vadd.f32 %v1865, %v2155
        %v2157 = vpop.f32.mrb[0].mxu0
        %v2158 = vadd.f32 %v1869, %v2157
        %2159 = vmatprep.mubr.f32.mxu0 0.0
        %2160 = vmatmul.mubr.f32.gmra.mrb[0].mxu0 %v1782
        %v2161 = vpop.f32.mrb[0].mxu0
        %v2162 = vadd.f32 %v1865, %v2161
        %v2163 = vpop.f32.mrb[0].mxu0
        %v2164 = vadd.f32 %v1869, %v2163
        %2165 = vmatprep.mubr.f32.mxu0 0.0
        %2166 = vmatmul.mubr.f32.gmra.mrb[0].mxu0 %v1783
        %v2167 = vpop.f32.mrb[0].mxu0
        %v2168 = vadd.f32 %v1865, %v2167
        %v2169 = vpop.f32.mrb[0].mxu0
        %v2170 = vadd.f32 %v1869, %v2169
        %2171 = vmatprep.mubr.f32.mxu0 0.0
        %2172 = vmatmul.mubr.f32.gmra.mrb[0].mxu0 %v1784
        %v2173 = vpop.f32.mrb[0].mxu0
        %v2174 = vadd.f32 %v1865, %v2173
        %v2175 = vpop.f32.mrb[0].mxu0
        %v2176 = vadd.f32 %v1869, %v2175
        %2177 = vmatprep.mubr.f32.mxu0 0.0
        %2178 = vmatmul.mubr.f32.gmra.mrb[0].mxu0 %v1785
        %v2179 = vpop.f32.mrb[0].mxu0
        %v2180 = vadd.f32 %v1865, %v2179
        %v2181 = vpop.f32.mrb[0].mxu0
        %v2182 = vadd.f32 %v1869, %v2181
        %2183 = vmatprep.mubr.f32.mxu0 0.0
        %2184 = vmatmul.mubr.f32.gmra.mrb[0].mxu0 %v1786
        %v2185 = vpop.f32.mrb[0].mxu0
        %v2186 = vadd.f32 %v1865, %v2185
        %v2187 = vpop.f32.mrb[0].mxu0
        %v2188 = vadd.f32 %v1869, %v2187
        %2189 = vmatprep.mubr.f32.mxu0 0.0
        %2190 = vmatmul.mubr.f32.gmra.mrb[0].mxu0 %v1787
        %v2191 = vpop.f32.mrb[0].mxu0
        %v2192 = vadd.f32 %v1865, %v2191
        %v2193 = vpop.f32.mrb[0].mxu0
        %v2194 = vadd.f32 %v1869, %v2193
        %2195 = vdwg.mxu0
        %v2196 = vtanh.pop %v1941
        %v2197 = vtanh.pop %v1943
        %v2198 = vtanh.pop %v2102
        %v2199 = vtanh.pop %v2104
        %v2200 = vtanh.pop %v1947
        %v2201 = vtanh.pop %v1949
        %v2202 = vtanh.pop %v2108
        %v2203 = vtanh.pop %v2110
        %v2204 = vtanh.pop %v1953
        %v2205 = vtanh.pop %v1955
        %v2206 = vtanh.pop %v2114
        %v2207 = vtanh.pop %v2116
        %v2208 = vtanh.pop %v1959
        %v2209 = vtanh.pop %v1961
        %v2210 = vtanh.pop %v2120
        %v2211 = vtanh.pop %v2122
        %v2212 = vtanh.pop %v1965
        %v2213 = vtanh.pop %v1967
        %v2214 = vtanh.pop %v2126
        %v2215 = vtanh.pop %v2128
        %v2216 = vtanh.pop %v1971
        %v2217 = vtanh.pop %v1973
        %v2218 = vtanh.pop %v2132
        %v2219 = vtanh.pop %v2134
        %v2220 = vtanh.pop %v1977
        %v2221 = vtanh.pop %v1979
        %v2222 = vtanh.pop %v2138
        %v2223 = vtanh.pop %v2140
        %v2224 = vtanh.pop %v1983
        %v2225 = vtanh.pop %v1985
        %v2226 = vtanh.pop %v2144
        %v2227 = vtanh.pop %v2146
        %v2228 = vtanh.pop %v1989
        %v2229 = vtanh.pop %v1991
        %v2230 = vtanh.pop %v2150
        %v2231 = vtanh.pop %v2152
        %v2232 = vtanh.pop %v1995
        %v2233 = vtanh.pop %v1997
        %v2234 = vtanh.pop %v2156
        %v2235 = vtanh.pop %v2158
        %v2236 = vtanh.pop %v2001
        %v2237 = vtanh.pop %v2003
        %v2238 = vtanh.pop %v2162
        %v2239 = vtanh.pop %v2164
        %v2240 = vtanh.pop %v2007
        %v2241 = vtanh.pop %v2009
        %v2242 = vtanh.pop %v2168
        %v2243 = vtanh.pop %v2170
        %v2244 = vtanh.pop %v2013
        %v2245 = vtanh.pop %v2015
        %v2246 = vtanh.pop %v2174
        %v2247 = vtanh.pop %v2176
        %v2248 = vtanh.pop %v2019
        %v2249 = vtanh.pop %v2021
        %v2250 = vtanh.pop %v2180
        %v2251 = vtanh.pop %v2182
        %v2252 = vtanh.pop %v2025
        %v2253 = vtanh.pop %v2027
        %v2254 = vtanh.pop %v2186
        %v2255 = vtanh.pop %v2188
        %v2256 = vtanh.pop %v2031
        %v2257 = vtanh.pop %v2033
        %v2258 = vtanh.pop %v2192
        %v2259 = vtanh.pop %v2194
        %v2260 = vld [vmem:[#allocation11] sm:$0xff]
        %v2261 = vld [vmem:[#allocation11 + $0x8] sm:$0xff]
        %v2262 = vld [vmem:[#allocation11 + $0x10] sm:$0xff]
        %v2263 = vld [vmem:[#allocation11 + $0x18] sm:$0xff]
        %v2264 = vld [vmem:[#allocation11 + $0x20] sm:$0xff]
        %v2265 = vld [vmem:[#allocation11 + $0x28] sm:$0xff]
        %v2266 = vld [vmem:[#allocation11 + $0x30] sm:$0xff]
        %v2267 = vld [vmem:[#allocation11 + $0x38] sm:$0xff]
        %v2268 = vld [vmem:[#allocation11 + $0x40] sm:$0xff]
        %v2269 = vld [vmem:[#allocation11 + $0x48] sm:$0xff]
        %v2270 = vld [vmem:[#allocation11 + $0x50] sm:$0xff]
        %v2271 = vld [vmem:[#allocation11 + $0x58] sm:$0xff]
        %v2272 = vld [vmem:[#allocation11 + $0x60] sm:$0xff]
        %v2273 = vld [vmem:[#allocation11 + $0x68] sm:$0xff]
        %v2274 = vld [vmem:[#allocation11 + $0x70] sm:$0xff]
        %v2275 = vld [vmem:[#allocation11 + $0x78] sm:$0xff]
        %v2276 = vld [vmem:[#allocation11 + $0x80] sm:$0xff]
        %v2277 = vld [vmem:[#allocation11 + $0x88] sm:$0xff]
        %v2278 = vld [vmem:[#allocation11 + $0x90] sm:$0xff]
        %v2279 = vld [vmem:[#allocation11 + $0x98] sm:$0xff]
        %v2280 = vld [vmem:[#allocation11 + $0xa0] sm:$0xff]
        %v2281 = vld [vmem:[#allocation11 + $0xa8] sm:$0xff]
        %v2282 = vld [vmem:[#allocation11 + $0xb0] sm:$0xff]
        %v2283 = vld [vmem:[#allocation11 + $0xb8] sm:$0xff]
        %v2284 = vld [vmem:[#allocation11 + $0xc0] sm:$0xff]
        %v2285 = vld [vmem:[#allocation11 + $0xc8] sm:$0xff]
        %v2286 = vld [vmem:[#allocation11 + $0xd0] sm:$0xff]
        %v2287 = vld [vmem:[#allocation11 + $0xd8] sm:$0xff]
        %v2288 = vld [vmem:[#allocation11 + $0xe0] sm:$0xff]
        %v2289 = vld [vmem:[#allocation11 + $0xe8] sm:$0xff]
        %v2290 = vld [vmem:[#allocation11 + $0xf0] sm:$0xff]
        %v2291 = vld [vmem:[#allocation11 + $0xf8] sm:$0xff]
        %v2292 = vld [vmem:[#allocation11 + $0x100] sm:$0xff]
        %v2293 = vld [vmem:[#allocation11 + $0x108] sm:$0xff]
        %v2294 = vld [vmem:[#allocation11 + $0x110] sm:$0xff]
        %v2295 = vld [vmem:[#allocation11 + $0x118] sm:$0xff]
        %v2296 = vld [vmem:[#allocation11 + $0x120] sm:$0xff]
        %v2297 = vld [vmem:[#allocation11 + $0x128] sm:$0xff]
        %v2298 = vld [vmem:[#allocation11 + $0x130] sm:$0xff]
        %v2299 = vld [vmem:[#allocation11 + $0x138] sm:$0xff]
        %v2300 = vld [vmem:[#allocation11 + $0x140] sm:$0xff]
        %v2301 = vld [vmem:[#allocation11 + $0x148] sm:$0xff]
        %v2302 = vld [vmem:[#allocation11 + $0x150] sm:$0xff]
        %v2303 = vld [vmem:[#allocation11 + $0x158] sm:$0xff]
        %v2304 = vld [vmem:[#allocation11 + $0x160] sm:$0xff]
        %v2305 = vld [vmem:[#allocation11 + $0x168] sm:$0xff]
        %v2306 = vld [vmem:[#allocation11 + $0x170] sm:$0xff]
        %v2307 = vld [vmem:[#allocation11 + $0x178] sm:$0xff]
        %v2308 = vld [vmem:[#allocation11 + $0x180] sm:$0xff]
        %v2309 = vld [vmem:[#allocation11 + $0x188] sm:$0xff]
        %v2310 = vld [vmem:[#allocation11 + $0x190] sm:$0xff]
        %v2311 = vld [vmem:[#allocation11 + $0x198] sm:$0xff]
        %v2312 = vld [vmem:[#allocation11 + $0x1a0] sm:$0xff]
        %v2313 = vld [vmem:[#allocation11 + $0x1a8] sm:$0xff]
        %v2314 = vld [vmem:[#allocation11 + $0x1b0] sm:$0xff]
        %v2315 = vld [vmem:[#allocation11 + $0x1b8] sm:$0xff]
        %v2316 = vld [vmem:[#allocation11 + $0x1c0] sm:$0xff]
        %v2317 = vld [vmem:[#allocation11 + $0x1c8] sm:$0xff]
        %v2318 = vld [vmem:[#allocation11 + $0x1d0] sm:$0xff]
        %v2319 = vld [vmem:[#allocation11 + $0x1d8] sm:$0xff]
        %v2320 = vld [vmem:[#allocation11 + $0x1e0] sm:$0xff]
        %v2321 = vld [vmem:[#allocation11 + $0x1e8] sm:$0xff]
        %v2322 = vld [vmem:[#allocation11 + $0x1f0] sm:$0xff]
        %v2323 = vld [vmem:[#allocation11 + $0x1f8] sm:$0xff]
        %v2324 = vld [vmem:[%s9] sm:$0x1]
        %v2326 = vlaneseq
        %v2327 = vshrl.u32 %v2326, 7
        %v2328 = vsub.s32 0, %v2327
        %v2329 = vrot.slane %v2324, %v2328
        %2331 = vmatprep.subr.mxu0 0.0
        %2332 = vmatpush1.msra.mxu0 %v2260
        %2333 = vmatprep.subr.mxu0 0.0
        %2334 = vmatpush1.msra.mxu0 %v2261
        %2335 = vmatprep.subr.mxu0 0.0
        %2336 = vmatpush1.msra.mxu0 %v2262
        %2337 = vmatprep.subr.mxu0 0.0
        %2338 = vmatpush1.msra.mxu0 %v2263
        %2339 = vmatprep.subr.mxu0 0.0
        %2340 = vmatpush1.msra.mxu0 %v2264
        %2341 = vmatprep.subr.mxu0 0.0
        %2342 = vmatpush1.msra.mxu0 %v2265
        %2343 = vmatprep.subr.mxu0 0.0
        %2344 = vmatpush1.msra.mxu0 %v2266
        %2345 = vmatprep.subr.mxu0 0.0
        %2346 = vmatpush1.msra.mxu0 %v2267
        %2347 = vmatprep.subr.mxu0 0.0
        %2348 = vmatpush1.msra.mxu0 %v2268
        %2349 = vmatprep.subr.mxu0 0.0
        %2350 = vmatpush1.msra.mxu0 %v2269
        %2351 = vmatprep.subr.mxu0 0.0
        %2352 = vmatpush1.msra.mxu0 %v2270
        %2353 = vmatprep.subr.mxu0 0.0
        %2354 = vmatpush1.msra.mxu0 %v2271
        %2355 = vmatprep.subr.mxu0 0.0
        %2356 = vmatpush1.msra.mxu0 %v2272
        %2357 = vmatprep.subr.mxu0 0.0
        %2358 = vmatpush1.msra.mxu0 %v2273
        %2359 = vmatprep.subr.mxu0 0.0
        %2360 = vmatpush1.msra.mxu0 %v2274
        %2361 = vmatprep.subr.mxu0 0.0
        %2362 = vmatpush1.msra.mxu0 %v2275
        %2363 = vmatprep.subr.mxu0 0.0
        %2364 = vmatpush1.msra.mxu0 %v2276
        %2365 = vmatprep.subr.mxu0 0.0
        %2366 = vmatpush1.msra.mxu0 %v2277
        %2367 = vmatprep.subr.mxu0 0.0
        %2368 = vmatpush1.msra.mxu0 %v2278
        %2369 = vmatprep.subr.mxu0 0.0
        %2370 = vmatpush1.msra.mxu0 %v2279
        %2371 = vmatprep.subr.mxu0 0.0
        %2372 = vmatpush1.msra.mxu0 %v2280
        %2373 = vmatprep.subr.mxu0 0.0
        %2374 = vmatpush1.msra.mxu0 %v2281
        %2375 = vmatprep.subr.mxu0 0.0
        %2376 = vmatpush1.msra.mxu0 %v2282
        %2377 = vmatprep.subr.mxu0 0.0
        %2378 = vmatpush1.msra.mxu0 %v2283
        %2379 = vmatprep.subr.mxu0 0.0
        %2380 = vmatpush1.msra.mxu0 %v2284
        %2381 = vmatprep.subr.mxu0 0.0
        %2382 = vmatpush1.msra.mxu0 %v2285
        %2383 = vmatprep.subr.mxu0 0.0
        %2384 = vmatpush1.msra.mxu0 %v2286
        %2385 = vmatprep.subr.mxu0 0.0
        %2386 = vmatpush1.msra.mxu0 %v2287
        %2387 = vmatprep.subr.mxu0 0.0
        %2388 = vmatpush1.msra.mxu0 %v2288
        %2389 = vmatprep.subr.mxu0 0.0
        %2390 = vmatpush1.msra.mxu0 %v2289
        %2391 = vmatprep.subr.mxu0 0.0
        %2392 = vmatpush1.msra.mxu0 %v2290
        %2393 = vmatprep.subr.mxu0 0.0
        %2394 = vmatpush1.msra.mxu0 %v2291
        %2395 = vmatprep.mubr.f32.mxu0 %v2197
        %2396 = vmatmul.mubr.f32.gmra.mrb[0].mxu0 %v2196
        %v2397 = vpop.f32.mrb[0].mxu0
        %v2398 = vadd.f32 %v2329, %v2397
        %v2399 = vpop.f32.mrb[0].mxu0
        %2400 = vmatprep.mubr.f32.mxu0 %v2201
        %2401 = vmatmul.mubr.f32.gmra.mrb[0].mxu0 %v2200
        %v2402 = vpop.f32.mrb[0].mxu0
        %v2403 = vadd.f32 %v2329, %v2402
        %v2404 = vpop.f32.mrb[0].mxu0
        %2405 = vmatprep.mubr.f32.mxu0 %v2205
        %2406 = vmatmul.mubr.f32.gmra.mrb[0].mxu0 %v2204
        %v2407 = vpop.f32.mrb[0].mxu0
        %v2408 = vadd.f32 %v2329, %v2407
        %v2409 = vpop.f32.mrb[0].mxu0
        %2410 = vmatprep.mubr.f32.mxu0 %v2209
        %2411 = vmatmul.mubr.f32.gmra.mrb[0].mxu0 %v2208
        %v2412 = vpop.f32.mrb[0].mxu0
        %v2413 = vadd.f32 %v2329, %v2412
        %v2414 = vpop.f32.mrb[0].mxu0
        %2415 = vmatprep.mubr.f32.mxu0 %v2213
        %2416 = vmatmul.mubr.f32.gmra.mrb[0].mxu0 %v2212
        %v2417 = vpop.f32.mrb[0].mxu0
        %v2418 = vadd.f32 %v2329, %v2417
        %v2419 = vpop.f32.mrb[0].mxu0
        %2420 = vmatprep.mubr.f32.mxu0 %v2217
        %2421 = vmatmul.mubr.f32.gmra.mrb[0].mxu0 %v2216
        %v2422 = vpop.f32.mrb[0].mxu0
        %v2423 = vadd.f32 %v2329, %v2422
        %v2424 = vpop.f32.mrb[0].mxu0
        %2425 = vmatprep.mubr.f32.mxu0 %v2221
        %2426 = vmatmul.mubr.f32.gmra.mrb[0].mxu0 %v2220
        %v2427 = vpop.f32.mrb[0].mxu0
        %v2428 = vadd.f32 %v2329, %v2427
        %v2429 = vpop.f32.mrb[0].mxu0
        %2430 = vmatprep.mubr.f32.mxu0 %v2225
        %2431 = vmatmul.mubr.f32.gmra.mrb[0].mxu0 %v2224
        %v2432 = vpop.f32.mrb[0].mxu0
        %v2433 = vadd.f32 %v2329, %v2432
        %v2434 = vpop.f32.mrb[0].mxu0
        %2435 = vmatprep.mubr.f32.mxu0 %v2229
        %2436 = vmatmul.mubr.f32.gmra.mrb[0].mxu0 %v2228
        %v2437 = vpop.f32.mrb[0].mxu0
        %v2438 = vadd.f32 %v2329, %v2437
        %v2439 = vpop.f32.mrb[0].mxu0
        %2440 = vmatprep.mubr.f32.mxu0 %v2233
        %2441 = vmatmul.mubr.f32.gmra.mrb[0].mxu0 %v2232
        %v2442 = vpop.f32.mrb[0].mxu0
        %v2443 = vadd.f32 %v2329, %v2442
        %v2444 = vpop.f32.mrb[0].mxu0
        %2445 = vmatprep.mubr.f32.mxu0 %v2237
        %2446 = vmatmul.mubr.f32.gmra.mrb[0].mxu0 %v2236
        %v2447 = vpop.f32.mrb[0].mxu0
        %v2448 = vadd.f32 %v2329, %v2447
        %v2449 = vpop.f32.mrb[0].mxu0
        %2450 = vmatprep.mubr.f32.mxu0 %v2241
        %2451 = vmatmul.mubr.f32.gmra.mrb[0].mxu0 %v2240
        %v2452 = vpop.f32.mrb[0].mxu0
        %v2453 = vadd.f32 %v2329, %v2452
        %v2454 = vpop.f32.mrb[0].mxu0
        %2455 = vmatprep.mubr.f32.mxu0 %v2245
        %2456 = vmatmul.mubr.f32.gmra.mrb[0].mxu0 %v2244
        %v2457 = vpop.f32.mrb[0].mxu0
        %v2458 = vadd.f32 %v2329, %v2457
        %v2459 = vpop.f32.mrb[0].mxu0
        %2460 = vmatprep.mubr.f32.mxu0 %v2249
        %2461 = vmatmul.mubr.f32.gmra.mrb[0].mxu0 %v2248
        %v2462 = vpop.f32.mrb[0].mxu0
        %v2463 = vadd.f32 %v2329, %v2462
        %v2464 = vpop.f32.mrb[0].mxu0
        %2465 = vmatprep.mubr.f32.mxu0 %v2253
        %2466 = vmatmul.mubr.f32.gmra.mrb[0].mxu0 %v2252
        %v2467 = vpop.f32.mrb[0].mxu0
        %v2468 = vadd.f32 %v2329, %v2467
        %v2469 = vpop.f32.mrb[0].mxu0
        %2470 = vmatprep.mubr.f32.mxu0 %v2257
        %2471 = vmatmul.mubr.f32.gmra.mrb[0].mxu0 %v2256
        %v2472 = vpop.f32.mrb[0].mxu0
        %v2473 = vadd.f32 %v2329, %v2472
        %v2474 = vpop.f32.mrb[0].mxu0
        %2475 = vdwg.mxu0
        %2476 = vmatprep.subr.mxu0 0.0
        %2477 = vmatpush1.msra.mxu0 %v2292
        %2478 = vmatprep.subr.mxu0 0.0
        %2479 = vmatpush1.msra.mxu0 %v2293
        %2480 = vmatprep.subr.mxu0 0.0
        %2481 = vmatpush1.msra.mxu0 %v2294
        %2482 = vmatprep.subr.mxu0 0.0
        %2483 = vmatpush1.msra.mxu0 %v2295
        %2484 = vmatprep.subr.mxu0 0.0
        %2485 = vmatpush1.msra.mxu0 %v2296
        %2486 = vmatprep.subr.mxu0 0.0
        %2487 = vmatpush1.msra.mxu0 %v2297
        %2488 = vmatprep.subr.mxu0 0.0
        %2489 = vmatpush1.msra.mxu0 %v2298
        %2490 = vmatprep.subr.mxu0 0.0
        %2491 = vmatpush1.msra.mxu0 %v2299
        %2492 = vmatprep.subr.mxu0 0.0
        %2493 = vmatpush1.msra.mxu0 %v2300
        %2494 = vmatprep.subr.mxu0 0.0
        %2495 = vmatpush1.msra.mxu0 %v2301
        %2496 = vmatprep.subr.mxu0 0.0
        %2497 = vmatpush1.msra.mxu0 %v2302
        %2498 = vmatprep.subr.mxu0 0.0
        %2499 = vmatpush1.msra.mxu0 %v2303
        %2500 = vmatprep.subr.mxu0 0.0
        %2501 = vmatpush1.msra.mxu0 %v2304
        %2502 = vmatprep.subr.mxu0 0.0
        %2503 = vmatpush1.msra.mxu0 %v2305
        %2504 = vmatprep.subr.mxu0 0.0
        %2505 = vmatpush1.msra.mxu0 %v2306
        %2506 = vmatprep.subr.mxu0 0.0
        %2507 = vmatpush1.msra.mxu0 %v2307
        %2508 = vmatprep.subr.mxu0 0.0
        %2509 = vmatpush1.msra.mxu0 %v2308
        %2510 = vmatprep.subr.mxu0 0.0
        %2511 = vmatpush1.msra.mxu0 %v2309
        %2512 = vmatprep.subr.mxu0 0.0
        %2513 = vmatpush1.msra.mxu0 %v2310
        %2514 = vmatprep.subr.mxu0 0.0
        %2515 = vmatpush1.msra.mxu0 %v2311
        %2516 = vmatprep.subr.mxu0 0.0
        %2517 = vmatpush1.msra.mxu0 %v2312
        %2518 = vmatprep.subr.mxu0 0.0
        %2519 = vmatpush1.msra.mxu0 %v2313
        %2520 = vmatprep.subr.mxu0 0.0
        %2521 = vmatpush1.msra.mxu0 %v2314
        %2522 = vmatprep.subr.mxu0 0.0
        %2523 = vmatpush1.msra.mxu0 %v2315
        %2524 = vmatprep.subr.mxu0 0.0
        %2525 = vmatpush1.msra.mxu0 %v2316
        %2526 = vmatprep.subr.mxu0 0.0
        %2527 = vmatpush1.msra.mxu0 %v2317
        %2528 = vmatprep.subr.mxu0 0.0
        %2529 = vmatpush1.msra.mxu0 %v2318
        %2530 = vmatprep.subr.mxu0 0.0
        %2531 = vmatpush1.msra.mxu0 %v2319
        %2532 = vmatprep.subr.mxu0 0.0
        %2533 = vmatpush1.msra.mxu0 %v2320
        %2534 = vmatprep.subr.mxu0 0.0
        %2535 = vmatpush1.msra.mxu0 %v2321
        %2536 = vmatprep.subr.mxu0 0.0
        %2537 = vmatpush1.msra.mxu0 %v2322
        %2538 = vmatprep.subr.mxu0 0.0
        %2539 = vmatpush1.msra.mxu0 %v2323
        %2540 = vmatprep.mubr.f32.mxu0 %v2199
        %2541 = vmatmul.mubr.f32.gmra.mrb[0].mxu0 %v2198
        %v2542 = vpop.f32.mrb[0].mxu0
        %v2543 = vadd.f32 %v2398, %v2542
        %v2544 = vpop.f32.mrb[0].mxu0
        %2545 = vmatprep.mubr.f32.mxu0 %v2203
        %2546 = vmatmul.mubr.f32.gmra.mrb[0].mxu0 %v2202
        %v2547 = vpop.f32.mrb[0].mxu0
        %v2548 = vadd.f32 %v2403, %v2547
        %v2549 = vpop.f32.mrb[0].mxu0
        %2550 = vmatprep.mubr.f32.mxu0 %v2207
        %2551 = vmatmul.mubr.f32.gmra.mrb[0].mxu0 %v2206
        %v2552 = vpop.f32.mrb[0].mxu0
        %v2553 = vadd.f32 %v2408, %v2552
        %v2554 = vpop.f32.mrb[0].mxu0
        %2555 = vmatprep.mubr.f32.mxu0 %v2211
        %2556 = vmatmul.mubr.f32.gmra.mrb[0].mxu0 %v2210
        %v2557 = vpop.f32.mrb[0].mxu0
        %v2558 = vadd.f32 %v2413, %v2557
        %v2559 = vpop.f32.mrb[0].mxu0
        %2560 = vmatprep.mubr.f32.mxu0 %v2215
        %2561 = vmatmul.mubr.f32.gmra.mrb[0].mxu0 %v2214
        %v2562 = vpop.f32.mrb[0].mxu0
        %v2563 = vadd.f32 %v2418, %v2562
        %v2564 = vpop.f32.mrb[0].mxu0
        %2565 = vmatprep.mubr.f32.mxu0 %v2219
        %2566 = vmatmul.mubr.f32.gmra.mrb[0].mxu0 %v2218
        %v2567 = vpop.f32.mrb[0].mxu0
        %v2568 = vadd.f32 %v2423, %v2567
        %v2569 = vpop.f32.mrb[0].mxu0
        %2570 = vmatprep.mubr.f32.mxu0 %v2223
        %2571 = vmatmul.mubr.f32.gmra.mrb[0].mxu0 %v2222
        %v2572 = vpop.f32.mrb[0].mxu0
        %v2573 = vadd.f32 %v2428, %v2572
        %v2574 = vpop.f32.mrb[0].mxu0
        %2575 = vmatprep.mubr.f32.mxu0 %v2227
        %2576 = vmatmul.mubr.f32.gmra.mrb[0].mxu0 %v2226
        %v2577 = vpop.f32.mrb[0].mxu0
        %v2578 = vadd.f32 %v2433, %v2577
        %v2579 = vpop.f32.mrb[0].mxu0
        %2580 = vmatprep.mubr.f32.mxu0 %v2231
        %2581 = vmatmul.mubr.f32.gmra.mrb[0].mxu0 %v2230
        %v2582 = vpop.f32.mrb[0].mxu0
        %v2583 = vadd.f32 %v2438, %v2582
        %v2584 = vpop.f32.mrb[0].mxu0
        %2585 = vmatprep.mubr.f32.mxu0 %v2235
        %2586 = vmatmul.mubr.f32.gmra.mrb[0].mxu0 %v2234
        %v2587 = vpop.f32.mrb[0].mxu0
        %v2588 = vadd.f32 %v2443, %v2587
        %v2589 = vpop.f32.mrb[0].mxu0
        %2590 = vmatprep.mubr.f32.mxu0 %v2239
        %2591 = vmatmul.mubr.f32.gmra.mrb[0].mxu0 %v2238
        %v2592 = vpop.f32.mrb[0].mxu0
        %v2593 = vadd.f32 %v2448, %v2592
        %v2594 = vpop.f32.mrb[0].mxu0
        %2595 = vmatprep.mubr.f32.mxu0 %v2243
        %2596 = vmatmul.mubr.f32.gmra.mrb[0].mxu0 %v2242
        %v2597 = vpop.f32.mrb[0].mxu0
        %v2598 = vadd.f32 %v2453, %v2597
        %v2599 = vpop.f32.mrb[0].mxu0
        %2600 = vmatprep.mubr.f32.mxu0 %v2247
        %2601 = vmatmul.mubr.f32.gmra.mrb[0].mxu0 %v2246
        %v2602 = vpop.f32.mrb[0].mxu0
        %v2603 = vadd.f32 %v2458, %v2602
        %v2604 = vpop.f32.mrb[0].mxu0
        %2605 = vmatprep.mubr.f32.mxu0 %v2251
        %2606 = vmatmul.mubr.f32.gmra.mrb[0].mxu0 %v2250
        %v2607 = vpop.f32.mrb[0].mxu0
        %v2608 = vadd.f32 %v2463, %v2607
        %v2609 = vpop.f32.mrb[0].mxu0
        %2610 = vmatprep.mubr.f32.mxu0 %v2255
        %2611 = vmatmul.mubr.f32.gmra.mrb[0].mxu0 %v2254
        %v2612 = vpop.f32.mrb[0].mxu0
        %v2613 = vadd.f32 %v2468, %v2612
        %v2614 = vpop.f32.mrb[0].mxu0
        %2615 = vmatprep.mubr.f32.mxu0 %v2259
        %2616 = vmatmul.mubr.f32.gmra.mrb[0].mxu0 %v2258
        %v2617 = vpop.f32.mrb[0].mxu0
        %v2618 = vadd.f32 %v2473, %v2617
        %v2619 = vpop.f32.mrb[0].mxu0
        %2620 = vdwg.mxu0
        %v2621 = vtanh.pop %v2543
        %v2622 = vtanh.pop %v2548
        %v2623 = vtanh.pop %v2553
        %v2624 = vtanh.pop %v2558
        %v2625 = vtanh.pop %v2563
        %v2626 = vtanh.pop %v2568
        %v2627 = vtanh.pop %v2573
        %v2628 = vtanh.pop %v2578
        %v2629 = vtanh.pop %v2583
        %v2630 = vtanh.pop %v2588
        %v2631 = vtanh.pop %v2593
        %v2632 = vtanh.pop %v2598
        %v2633 = vtanh.pop %v2603
        %v2634 = vtanh.pop %v2608
        %v2635 = vtanh.pop %v2613
        %v2636 = vtanh.pop %v2618
        %2637 = vst [vmem:[%s506] sm:$0xff] %v2621
        %2638 = vst [vmem:[%s506 + $0x8] sm:$0xff] %v2622
        %2639 = vst [vmem:[%s506 + $0x10] sm:$0xff] %v2623
        %2640 = vst [vmem:[%s506 + $0x18] sm:$0xff] %v2624
        %2641 = vst [vmem:[%s506 + $0x20] sm:$0xff] %v2625
        %2642 = vst [vmem:[%s506 + $0x28] sm:$0xff] %v2626
        %2643 = vst [vmem:[%s506 + $0x30] sm:$0xff] %v2627
        %2644 = vst [vmem:[%s506 + $0x38] sm:$0xff] %v2628
        %2645 = vst [vmem:[%s506 + $0x40] sm:$0xff] %v2629
        %2646 = vst [vmem:[%s506 + $0x48] sm:$0xff] %v2630
        %2647 = vst [vmem:[%s506 + $0x50] sm:$0xff] %v2631
        %2648 = vst [vmem:[%s506 + $0x58] sm:$0xff] %v2632
        %2649 = vst [vmem:[%s506 + $0x60] sm:$0xff] %v2633
        %2650 = vst [vmem:[%s506 + $0x68] sm:$0xff] %v2634
        %2651 = vst [vmem:[%s506 + $0x70] sm:$0xff] %v2635
        %2652 = vst [vmem:[%s506 + $0x78] sm:$0xff] %v2636
        %2653 = vst [vmem:[%s513] sm:$0xff] %v1660
        %2654 = vst [vmem:[%s513 + $0x8] sm:$0xff] %v1661
        %2655 = vst [vmem:[%s513 + $0x10] sm:$0xff] %v1662
        %2656 = vst [vmem:[%s513 + $0x18] sm:$0xff] %v1663
        %2657 = vst [vmem:[%s513 + $0x20] sm:$0xff] %v1664
        %2658 = vst [vmem:[%s513 + $0x28] sm:$0xff] %v1665
        %2659 = vst [vmem:[%s513 + $0x30] sm:$0xff] %v1666
        %2660 = vst [vmem:[%s513 + $0x38] sm:$0xff] %v1667
        %2661 = vst [vmem:[%s513 + $0x40] sm:$0xff] %v1668
        %2662 = vst [vmem:[%s513 + $0x48] sm:$0xff] %v1669
        %2663 = vst [vmem:[%s513 + $0x50] sm:$0xff] %v1670
        %2664 = vst [vmem:[%s513 + $0x58] sm:$0xff] %v1671
        %2665 = vst [vmem:[%s513 + $0x60] sm:$0xff] %v1672
        %2666 = vst [vmem:[%s513 + $0x68] sm:$0xff] %v1673
        %2667 = vst [vmem:[%s513 + $0x70] sm:$0xff] %v1674
        %2668 = vst [vmem:[%s513 + $0x78] sm:$0xff] %v1675
        %2669 = vst [vmem:[%s513 + $0x80] sm:$0xff] %v1676
        %2670 = vst [vmem:[%s513 + $0x88] sm:$0xff] %v1677
        %2671 = vst [vmem:[%s513 + $0x90] sm:$0xff] %v1678
        %2672 = vst [vmem:[%s513 + $0x98] sm:$0xff] %v1679
        %2673 = vst [vmem:[%s513 + $0xa0] sm:$0xff] %v1680
        %2674 = vst [vmem:[%s513 + $0xa8] sm:$0xff] %v1681
        %2675 = vst [vmem:[%s513 + $0xb0] sm:$0xff] %v1682
        %2676 = vst [vmem:[%s513 + $0xb8] sm:$0xff] %v1683
        %2677 = vst [vmem:[%s513 + $0xc0] sm:$0xff] %v1684
        %2678 = vst [vmem:[%s513 + $0xc8] sm:$0xff] %v1685
        %2679 = vst [vmem:[%s513 + $0xd0] sm:$0xff] %v1686
        %2680 = vst [vmem:[%s513 + $0xd8] sm:$0xff] %v1687
        %2681 = vst [vmem:[%s513 + $0xe0] sm:$0xff] %v1688
        %2682 = vst [vmem:[%s513 + $0xe8] sm:$0xff] %v1689
        %2683 = vst [vmem:[%s513 + $0xf0] sm:$0xff] %v1690
        %2684 = vst [vmem:[%s513 + $0xf8] sm:$0xff] %v1691
        %s2685 = sand.u32 %s265, 1
        %s2686 = scalar_lea.sflag [#allocation4], %s2685
        %s2687 = sand.u32 %s265, 1
        %s2688 = smul.addr %s2687, 128
        %s2689 = scalar_lea.vmem [#allocation13], %s2688
        %s2690 = sand.u32 %s291, 1
        %s2691 = scalar_lea.sflag [#allocation15], %s2690
        %s2692 = sand.u32 %s291, 1
        %s2693 = smul.addr %s2692, 256
        %s2694 = scalar_lea.vmem [#allocation14], %s2693
        // Predicated region
        $region85: #{tpu_custom_call.1} parent=59 // pred_check
          %p2695 = pneg %p275
        $region86: #{tpu_custom_call.1} parent=59 // pred_check_branch
          %2697 = sbr.rel (%p2695) target = $region88
        $region87: #{tpu_custom_call.1} parent=59 // pred_region
          %s2698 = smul.u32 16, %s37
          %s2700 = ssub.s32 2048, 2048
          %2701 = vsyncadd %s2686, %s2700
          %s2702 = smul.addr %s2698, 128
          %s2703 = scalar_lea.hbm %s10, %s2702
          %s2704 = sshll.u32 %s2689, 4
          %s2705 = int_to_ptr.vmem [resolvable:$true] %s2704
          %2710 = dma.vmem_to_hbm [thread:$0]  %s2705, 2048, %s2703, %s2686, 128, 128, 8
        $region88: #{tpu_custom_call.1} parent=59 // pred_fallthru
          _
        // Predicated region
        $region89: #{tpu_custom_call.1} parent=59 // pred_check
          %p2711 = pneg %p301
        $region90: #{tpu_custom_call.1} parent=59 // pred_check_branch
          %2713 = sbr.rel (%p2711) target = $region92
        $region91: #{tpu_custom_call.1} parent=59 // pred_region
          %s2714 = smul.u32 16, %s37
          %s2716 = ssub.s32 4096, 4096
          %2717 = vsyncadd %s2691, %s2716
          %s2718 = smul.addr %s2714, 2
          %s2719 = smul.addr %s2718, 128
          %s2720 = scalar_lea.hbm %s11, %s2719
          %s2721 = sshll.u32 %s2694, 4
          %s2722 = int_to_ptr.vmem [resolvable:$true] %s2721
          %2727 = dma.vmem_to_hbm [thread:$0]  %s2722, 4096, %s2720, %s2691, 256, 256, 16
        $region92: #{tpu_custom_call.1} parent=59 // pred_fallthru
          _
      $region60: #{tpu_custom_call.1} parent=5 // pred_fallthru
        _
      %p2728 = scmp.le.s32.totalorder 2, %s32
      // Predicated region
      $region93: #{tpu_custom_call.1} parent=5 // pred_check
        %p2729 = pneg %p2728
      $region94: #{tpu_custom_call.1} parent=5 // pred_check_branch
        %2731 = sbr.rel (%p2729) target = $region96
      $region95: #{tpu_custom_call.1} parent=5 // pred_region
        %s2732 = ssub.s32 %s32, 2
        // Predicated region
        $region97: #{tpu_custom_call.1} parent=95 // pred_check
          %p2733 = pneg %p281
        $region98: #{tpu_custom_call.1} parent=95 // pred_check_branch
          %2735 = sbr.rel (%p2733) target = $region100
        $region99: #{tpu_custom_call.1} parent=95 // pred_region
          %s2736 = sand.u32 %s266, 1
          %s2737 = scalar_lea.sflag [#allocation4], %s2736
          %s2738 = sand.u32 %s266, 1
          %s2739 = smul.addr %s2738, 128
          %s2740 = scalar_lea.vmem [#allocation13], %s2739
          %2741 = dma.done %s2737, 2048
        $region100: #{tpu_custom_call.1} parent=95 // pred_fallthru
          _
        // Predicated region
        $region101: #{tpu_custom_call.1} parent=95 // pred_check
          %p2742 = pneg %p307
        $region102: #{tpu_custom_call.1} parent=95 // pred_check_branch
          %2744 = sbr.rel (%p2742) target = $region104
        $region103: #{tpu_custom_call.1} parent=95 // pred_region
          %s2745 = sand.u32 %s292, 1
          %s2746 = scalar_lea.sflag [#allocation15], %s2745
          %s2747 = sand.u32 %s292, 1
          %s2748 = smul.addr %s2747, 256
          %s2749 = scalar_lea.vmem [#allocation14], %s2748
          %2750 = dma.done %s2746, 4096
        $region104: #{tpu_custom_call.1} parent=95 // pred_fallthru
          _
      $region96: #{tpu_custom_call.1} parent=5 // pred_fallthru
        _
    $region6: #{tpu_custom_call.1} parent=1 // loop_footer
      %s36 = sadd.s32 1, %s32
    $region7: #{tpu_custom_call.1} parent=1 // loop_footer_branch
      %31 = sbr.rel target = $region3
    $region8: #{tpu_custom_call.1} parent=1 // loop_exit
      _
    %2751 = vsyncpa [#allocation3], 1
    %s2752 = scalar_lea.sflag [#allocation3], 1
    %2753 = vsyncpa %s2752, 1
    %2754 = vsyncpa [#allocation6], 1
    %s2755 = scalar_lea.sflag [#allocation6], 1
    %2756 = vsyncpa %s2755, 1
    %2757 = vsyncpa [#allocation9], 1
    %2758 = vsyncpa [#allocation12], 1
    %2759 = vsyncpa [#allocation4], 1
    %s2760 = scalar_lea.sflag [#allocation4], 1
    %2761 = vsyncpa %s2760, 1
    %2762 = vsyncpa [#allocation15], 1
    %s2763 = scalar_lea.sflag [#allocation15], 1
    %2764 = vsyncpa %s2763, 1

</llo_original>
